<compile_context>
chip_gen: v5e
topology: v5e:2x2
jax: 0.10.0
libtpu: 0.0.40
codegen_flags: <defaults>
</compile_context>

<pallas_src>
import jax
import jax.numpy as jnp
from jax.experimental import pallas as pl
from jax.experimental.pallas import tpu as pltpu

# ---------------------------------------------------------------------------
# Hyper-parameters (small synthetic config consistent with __init__)
# ---------------------------------------------------------------------------
VOCAB_SIZE = 20
PAD_IDX = 0            # vocab.padding_idx
REL_DIM = 16           # rel_dim
HIDDEN = 32            # hidden_size
EMBED_DIM = 32         # embed_dim
NUM_LAYERS = 2
BIDIRECTIONAL = True   # tot_dim = 2 * hidden_size


# ---------------------------------------------------------------------------
# Fused RelationEncoder kernel: 2-layer direction-fused bi-GRU + out_proj
# ---------------------------------------------------------------------------
def relation_encoder_kernel(
    xcat_ref,    # (T*Bp, 2R)  bf16  per step i: [x(i) | x(T-1-i)]
    mask_ref,    # (T*Bp, 2H)  f32   per step i: [valid_fwd(i) | valid_bwd(T-1-i)]
    w_ref,       # (2R+8H, 6H) bf16  packed weight slab (see pack_params)
    b_ref,       # (4, 6H)     f32   rows: [bias0_fused, bias1_fused, bhn0, bhn1]
    wout_ref,    # (2H, E)     bf16  out_proj weight (pre-transposed)
    bout_ref,    # (1, E)      f32
    out_ref,     # (Bp, E)     f32
    gi0_ref,     # (T*Bp, 6H)  f32   scratch: layer-0 input gates (stacked layout)
    gi1_ref,     # (T*Bp, 6H)  f32   scratch: layer-1 input gates
    seq_ref,     # (T*Bp, 2H)  f32   scratch: layer-0 outputs  [f(i) | b(T-1-i)]
    seqrev_ref,  # (T*Bp, 2H)  f32   scratch: time-reversed    [f(T-1-i) | b(i)]
):
    TB, R2 = xcat_ref.shape
    Bp, _ = out_ref.shape
    T = TB // Bp
    H2 = seq_ref.shape[1]          # 2H
    H4 = 2 * H2                    # 4H  (r|z groups, exactly 128 lanes for H=32)
    H6 = 3 * H2                    # 6H
    f32 = jnp.float32
    bf16 = jnp.bfloat16

    def bidir_gru(gi_ref, whh, bhn_row, store_seq):
        # whh: (2H, 6H) bf16 block-diagonal value; bhn_row: (1, 2H) f32.
        bhn = jnp.broadcast_to(bhn_row, (Bp, H2))          # hoisted broadcast
        h = jnp.zeros((Bp, H2), f32)                       # [h_fwd | h_bwd]
        for i in range(T):                                 # static -> free ref views
            row = pl.ds(i * Bp, Bp)
            gi = gi_ref[row, :]                            # (Bp, 6H) f32
            gh = jnp.dot(h.astype(bf16), whh, preferred_element_type=f32)
            rz = jax.nn.sigmoid(gi[:, 0:H4] + gh[:, 0:H4])
            r = rz[:, 0:H2]
            z = rz[:, H2:H4]
            n = jnp.tanh(gi[:, H4:H6] + r * (gh[:, H4:H6] + bhn))
            h_new = n + z * (h - n)                        # == (1-z)*n + z*h
            valid = mask_ref[row, :] > 0.5                 # one cmp + one vsel
            h = jnp.where(valid, h_new, h)
            if store_seq:
                seq_ref[row, :] = h
                seqrev_ref[pl.ds((T - 1 - i) * Bp, Bp), :] = h
        return h                                           # final [h_fwd | h_bwd]

    # ---- layer 0: input gates for all steps in one hoisted MXU matmul ----
    gi0_ref[...] = (jnp.dot(xcat_ref[...], w_ref[pl.ds(0, R2), :],
                            preferred_element_type=f32) + b_ref[0:1, :])
    bidir_gru(gi0_ref, w_ref[pl.ds(R2, H2), :], b_ref[2:3, 0:H2], store_seq=True)

    # ---- layer 1: input gates from layer-0 outputs.  The time-reversed copy
    #      (seqrev) lets both directions be produced with matmul + add, without
    #      any lane-axis concatenation. ----
    gi1_ref[...] = (
        jnp.dot(seq_ref[...].astype(bf16), w_ref[pl.ds(R2 + H2, H2), :],
                preferred_element_type=f32)
        + jnp.dot(seqrev_ref[...].astype(bf16), w_ref[pl.ds(R2 + 2 * H2, H2), :],
                  preferred_element_type=f32)
        + b_ref[1:2, :])
    h_final = bidir_gru(gi1_ref, w_ref[pl.ds(R2 + 3 * H2, H2), :],
                        b_ref[3:4, 0:H2], store_seq=False)

    # ---- combine_bidir(final_h)[-1] is already [h_fwd | h_bwd]; fused out_proj ----
    out_ref[...] = (jnp.dot(h_final.astype(bf16), wout_ref[...],
                            preferred_element_type=f32) + bout_ref[...])


# ---------------------------------------------------------------------------
# Wrapper-side weight packing (done once, outside the per-call path)
# Column layout of the fused 6H axis: [r_f | r_b | z_f | z_b | n_f | n_b]
# ---------------------------------------------------------------------------
def pack_params(params):
    H = HIDDEN

    def scatter_gates(w, off):            # w: (in, 3H) gate order (r, z, n)
        out = jnp.zeros((w.shape[0], 6 * H), w.dtype)
        out = out.at[:, off:off + H].set(w[:, 0:H])                    # r
        out = out.at[:, 2 * H + off:3 * H + off].set(w[:, H:2 * H])    # z
        out = out.at[:, 4 * H + off:5 * H + off].set(w[:, 2 * H:3 * H])  # n
        return out

    F, Bk = 0, H                           # column offsets for fwd / bwd groups

    # Layer-0 input weights, applied to xcat = [x(i) | x(T-1-i)].
    w0_cat = jnp.concatenate([scatter_gates(params["wih0f"], F),
                              scatter_gates(params["wih0b"], Bk)], axis=0)
    # Block-diagonal recurrent weights (input rows = [h_fwd | h_bwd]).
    whh0 = jnp.concatenate([scatter_gates(params["whh0f"], F),
                            scatter_gates(params["whh0b"], Bk)], axis=0)
    whh1 = jnp.concatenate([scatter_gates(params["whh1f"], F),
                            scatter_gates(params["whh1b"], Bk)], axis=0)
    # Layer-1 input weights: gi1[i] = seq[i] @ W1A + seqrev[i] @ W1B
    #   seq[i]    = [f(i)     | b(T-1-i)]
    #   seqrev[i] = [f(T-1-i) | b(i)    ]
    w1a = jnp.concatenate([scatter_gates(params["wih1f"][:H], F),
                           scatter_gates(params["wih1b"][H:], Bk)], axis=0)
    w1b = jnp.concatenate([scatter_gates(params["wih1b"][:H], Bk),
                           scatter_gates(params["wih1f"][H:], F)], axis=0)

    w_slab = jnp.concatenate([w0_cat, whh0, w1a, w1b, whh1],
                             axis=0).astype(jnp.bfloat16)      # (2R+8H, 6H)

    def fuse_bias(layer):
        bif, bib = params[f"bih{layer}f"], params[f"bih{layer}b"]
        bhf, bhb = params[f"bhh{layer}f"], params[f"bhh{layer}b"]
        g = lambda b, k: b[:, k * H:(k + 1) * H]
        # b_hr / b_hz folded into the input-gate bias; b_hn kept separate.
        bias = jnp.concatenate(
            [g(bif, 0) + g(bhf, 0), g(bib, 0) + g(bhb, 0),
             g(bif, 1) + g(bhf, 1), g(bib, 1) + g(bhb, 1),
             g(bif, 2),             g(bib, 2)], axis=1)         # (1, 6H)
        bhn = jnp.concatenate([g(bhf, 2), g(bhb, 2)], axis=1)   # (1, 2H)
        return bias, bhn

    bias0, bhn0 = fuse_bias(0)
    bias1, bhn1 = fuse_bias(1)
    pad = jnp.zeros((1, 4 * H), jnp.float32)
    bias_slab = jnp.concatenate(
        [bias0, bias1,
         jnp.concatenate([bhn0, pad], axis=1),
         jnp.concatenate([bhn1, pad], axis=1)], axis=0).astype(jnp.float32)

    return dict(rel_embed=params["rel_embed"],
                w_slab=w_slab,
                bias_slab=bias_slab,
                wout=params["wout"].astype(jnp.bfloat16),
                bout=params["bout"].astype(jnp.float32))


# ---------------------------------------------------------------------------
# Forward wrapper: embedding gather + operand layout (XLA glue) + ONE pallas_call
# ---------------------------------------------------------------------------
def relation_encoder_forward(packed, src_tokens, src_lengths):
    T, B = src_tokens.shape
    H = HIDDEN
    E = EMBED_DIM
    R = REL_DIM
    Bp = max(8, ((B + 7) // 8) * 8)        # pad batch to a sublane multiple

    lengths = jnp.full((Bp,), 1, jnp.int32).at[:B].set(src_lengths)
    tokens = jnp.full((T, Bp), PAD_IDX, src_tokens.dtype).at[:, :B].set(src_tokens)

    # Embedding lookup (gather) — left to XLA.  Dropout == identity (eval).
    x = packed["rel_embed"][tokens].astype(jnp.bfloat16)            # (T, Bp, R)
    x_rev = x[::-1]                                                  # time-reversed
    xcat = jnp.concatenate([x, x_rev], axis=-1).reshape(T * Bp, 2 * R)

    # Per-step fused validity mask: [valid_fwd(i) | valid_bwd(T-1-i)].
    step = jnp.arange(T, dtype=jnp.int32)
    m_f = (step[:, None] < lengths[None, :]).astype(jnp.float32)
    m_b = ((T - 1 - step)[:, None] < lengths[None, :]).astype(jnp.float32)
    mask = jnp.concatenate(
        [jnp.broadcast_to(m_f[:, :, None], (T, Bp, H)),
         jnp.broadcast_to(m_b[:, :, None], (T, Bp, H))],
        axis=2).reshape(T * Bp, 2 * H)

    # NOTE(v7x): single instance here.  When encoding many relation sequences,
    # add a leading grid axis over instances with dimension_semantics=("parallel",)
    # to use both TensorCores.
    out = pl.pallas_call(
        relation_encoder_kernel,
        out_shape=jax.ShapeDtypeStruct((Bp, E), jnp.float32),
        in_specs=[pl.BlockSpec(memory_space=pltpu.MemorySpace.VMEM)] * 6,
        out_specs=pl.BlockSpec(memory_space=pltpu.MemorySpace.VMEM),
        scratch_shapes=[
            pltpu.VMEM((T * Bp, 6 * H), jnp.float32),   # gi0
            pltpu.VMEM((T * Bp, 6 * H), jnp.float32),   # gi1
            pltpu.VMEM((T * Bp, 2 * H), jnp.float32),   # seq   (layer-0 outputs)
            pltpu.VMEM((T * Bp, 2 * H), jnp.float32),   # seqrev (time-reversed)
        ],
    )(xcat, mask, packed["w_slab"], packed["bias_slab"],
      packed["wout"], packed["bout"])
    return out[:B]


# ---------------------------------------------------------------------------
# Pure-JAX f32 reference (mirrors the PyTorch module) for a correctness check
# ---------------------------------------------------------------------------
def reference_forward(params, src_tokens, src_lengths):
    T, B = src_tokens.shape
    H = HIDDEN
    x = params["rel_embed"][src_tokens].astype(jnp.float32)          # (T, B, R)
    valid = (jnp.arange(T)[:, None] < src_lengths[None, :]
             ).astype(jnp.float32)[:, :, None]                       # (T, B, 1)

    def cell(x_t, h, wih, bih, whh, bhh):
        gi = x_t @ wih + bih
        gh = h @ whh + bhh
        r = jax.nn.sigmoid(gi[:, :H] + gh[:, :H])
        z = jax.nn.sigmoid(gi[:, H:2 * H] + gh[:, H:2 * H])
        n = jnp.tanh(gi[:, 2 * H:] + r * gh[:, 2 * H:])
        return (1.0 - z) * n + z * h

    def run_dir(inp, name, reverse):
        wih, bih = params["wih" + name], params["bih" + name]
        whh, bhh = params["whh" + name], params["bhh" + name]
        h = jnp.zeros((B, H), jnp.float32)
        outs = [None] * T
        ts = range(T - 1, -1, -1) if reverse else range(T)
        for t in ts:
            hn = cell(inp[t], h, wih, bih, whh, bhh)
            h = valid[t] * hn + (1.0 - valid[t]) * h
            outs[t] = h
        return jnp.stack(outs), h

    seq_f, _ = run_dir(x, "0f", False)
    seq_b, _ = run_dir(x, "0b", True)
    inp1 = jnp.concatenate([seq_f, seq_b], axis=-1)
    _, h1f = run_dir(inp1, "1f", False)
    _, h1b = run_dir(inp1, "1b", True)
    final = jnp.concatenate([h1f, h1b], axis=-1)
    return final @ params["wout"] + params["bout"]


# ---------------------------------------------------------------------------
# Deterministic parameter init (shapes from the module's __init__).
# Weights stored pre-transposed (in_dim, 3H); gate order (r, z, n) as in PyTorch.
# ---------------------------------------------------------------------------
def init_params(key):
    ks = jax.random.split(key, 6)

    def rnd(k, shape, scale=0.08):
        return scale * jax.random.normal(k, shape, jnp.float32)

    rel_embed = rnd(ks[0], (VOCAB_SIZE, REL_DIM), 0.1).at[PAD_IDX].set(0.0)

    def gru_cell(k, in_dim):
        k1, k2, k3, k4 = jax.random.split(k, 4)
        return dict(wih=rnd(k1, (in_dim, 3 * HIDDEN)),
                    whh=rnd(k2, (HIDDEN, 3 * HIDDEN)),
                    bih=rnd(k3, (1, 3 * HIDDEN)),
                    bhh=rnd(k4, (1, 3 * HIDDEN)))

    cells = {
        "0f": gru_cell(jax.random.fold_in(ks[1], 0), REL_DIM),
        "0b": gru_cell(jax.random.fold_in(ks[1], 1), REL_DIM),
        "1f": gru_cell(jax.random.fold_in(ks[2], 0), 2 * HIDDEN),
        "1b": gru_cell(jax.random.fold_in(ks[2], 1), 2 * HIDDEN),
    }

    params = dict(
        rel_embed=rel_embed,
        wout=0.02 * jax.random.normal(ks[3], (2 * HIDDEN, EMBED_DIM), jnp.float32),
        bout=jnp.zeros((1, EMBED_DIM), jnp.float32),   # reset_parameters: bias = 0
    )
    for name, c in cells.items():
        params["wih" + name] = c["wih"]
        params["bih" + name] = c["bih"]
        params["whh" + name] = c["whh"]
        params["bhh" + name] = c["bhh"]
    return params


if __name__ == "__main__":
    key = jax.random.PRNGKey(0)
    k_param, k_tok = jax.random.split(key)
    params = init_params(k_param)
    packed = pack_params(params)          # one-time weight packing

    T, B = 8, 4                           # seq_len, bsz (time-major)
    src_lengths = jnp.array([8, 5, 3, 6], dtype=jnp.int32)
    toks = jax.random.randint(k_tok, (T, B), 1, VOCAB_SIZE, dtype=jnp.int32)
    valid = jnp.arange(T, dtype=jnp.int32)[:, None] < src_lengths[None, :]
    src_tokens = jnp.where(valid, toks, PAD_IDX)     # pad past each length

    fwd = jax.jit(relation_encoder_forward)
    out = jax.block_until_ready(fwd(packed, src_tokens, src_lengths))

    assert out.shape == (B, EMBED_DIM), out.shape
    assert bool(jnp.all(jnp.isfinite(out)))

    # Correctness check against a pure-JAX f32 reference (bf16 matmul inputs in
    # the kernel -> loose-but-tight-enough tolerance).
    ref = reference_forward(params, src_tokens, src_lengths)
    err = float(jnp.max(jnp.abs(out - ref)))
    assert err < 3e-2, f"max abs err vs reference: {err}"

    print("KERNEL_OK")
</pallas_src>

<mosaic_0001>
module attributes {stable_mosaic.version = 11 : i64} {
  func.func @relation_encoder_kernel(%arg0: memref<64x32xbf16, #tpu.memory_space<vmem>>, %arg1: memref<64x64xf32, #tpu.memory_space<vmem>>, %arg2: memref<288x192xbf16, #tpu.memory_space<vmem>>, %arg3: memref<4x192xf32, #tpu.memory_space<vmem>>, %arg4: memref<64x32xbf16, #tpu.memory_space<vmem>>, %arg5: memref<1x32xf32, #tpu.memory_space<vmem>>, %arg6: memref<8x32xf32, #tpu.memory_space<vmem>>, %arg7: memref<64x192xf32, #tpu.memory_space<vmem>>, %arg8: memref<64x192xf32, #tpu.memory_space<vmem>>, %arg9: memref<64x64xf32, #tpu.memory_space<vmem>>, %arg10: memref<64x64xf32, #tpu.memory_space<vmem>>) attributes {dimension_semantics = [], scalar_prefetch = 0 : i64, scratch_operands = 4 : i64, tpu.core_type = #tpu.core_type<tc>} {
    %c0 = arith.constant 0 : index
    %c0_0 = arith.constant 0 : index
    %0 = vector.load %arg0[%c0, %c0_0] : memref<64x32xbf16, #tpu.memory_space<vmem>>, vector<64x32xbf16>
    %c0_1 = arith.constant 0 : index
    %c0_2 = arith.constant 0 : index
    %1 = vector.load %arg2[%c0_1, %c0_2] : memref<288x192xbf16, #tpu.memory_space<vmem>>, vector<32x192xbf16>
    %cst = arith.constant dense<0.000000e+00> : vector<64x192xf32>
    %2 = tpu.matmul %0, %1, %cst {dimension_numbers = #tpu.dot_dimension_numbers<[1], [0], [0], [1], [0, 0, 1, 1], [], []>} : vector<64x32xbf16>, vector<32x192xbf16>, vector<64x192xf32> -> vector<64x192xf32>
    %c0_3 = arith.constant 0 : index
    %c0_4 = arith.constant 0 : index
    %3 = vector.load %arg3[%c0_3, %c0_4] : memref<4x192xf32, #tpu.memory_space<vmem>>, vector<1x192xf32>
    %4 = vector.broadcast %3 : vector<1x192xf32> to vector<64x192xf32>
    %5 = arith.addf %2, %4 : vector<64x192xf32>
    %c0_5 = arith.constant 0 : index
    %c0_6 = arith.constant 0 : index
    %6 = vector.load %arg7[%c0_5, %c0_6] : memref<64x192xf32, #tpu.memory_space<vmem>>, vector<64x192xf32>
    tpu.vector_store %arg7[%c0_5, %c0_6], %5 {strides = array<i32>} : memref<64x192xf32, #tpu.memory_space<vmem>>, vector<64x192xf32>,
    %c32 = arith.constant 32 : index
    %c0_7 = arith.constant 0 : index
    %7 = vector.load %arg2[%c32, %c0_7] : memref<288x192xbf16, #tpu.memory_space<vmem>>, vector<64x192xbf16>
    %c2 = arith.constant 2 : index
    %c0_8 = arith.constant 0 : index
    %8 = vector.load %arg3[%c2, %c0_8] : memref<4x192xf32, #tpu.memory_space<vmem>>, vector<1x64xf32>
    %9 = vector.shape_cast %8 : vector<1x64xf32> to vector<1x64xf32>
    %10 = vector.broadcast %9 : vector<1x64xf32> to vector<8x64xf32>
    %cst_9 = arith.constant 0.000000e+00 : f32
    %11 = vector.broadcast %cst_9 : f32 to vector<8x64xf32>
    %c0_10 = arith.constant 0 : index
    %c0_11 = arith.constant 0 : index
    %12 = vector.load %arg7[%c0_10, %c0_11] : memref<64x192xf32, #tpu.memory_space<vmem>>, vector<8x192xf32>
    %13 = arith.truncf %11 : vector<8x64xf32> to vector<8x64xbf16>
    %cst_12 = arith.constant dense<0.000000e+00> : vector<8x192xf32>
    %14 = tpu.matmul %13, %7, %cst_12 {dimension_numbers = #tpu.dot_dimension_numbers<[1], [0], [0], [1], [0, 0, 1, 1], [], []>} : vector<8x64xbf16>, vector<64x192xbf16>, vector<8x192xf32> -> vector<8x192xf32>
    %15 = vector.extract_strided_slice %12 {offsets = [0, 0], sizes = [8, 128], strides = [1, 1]} : vector<8x192xf32> to vector<8x128xf32>
    %16 = vector.extract_strided_slice %14 {offsets = [0, 0], sizes = [8, 128], strides = [1, 1]} : vector<8x192xf32> to vector<8x128xf32>
    %17 = arith.addf %15, %16 : vector<8x128xf32>
    %18 = arith.negf %17 : vector<8x128xf32>
    %19 = math.exp %18 : vector<8x128xf32>
    %cst_13 = arith.constant 1.000000e+00 : f32
    %20 = vector.broadcast %cst_13 : f32 to vector<8x128xf32>
    %21 = arith.addf %20, %19 : vector<8x128xf32>
    %22 = arith.divf %20, %21 : vector<8x128xf32>
    %23 = vector.extract_strided_slice %22 {offsets = [0, 0], sizes = [8, 64], strides = [1, 1]} : vector<8x128xf32> to vector<8x64xf32>
    %24 = vector.extract_strided_slice %22 {offsets = [0, 64], sizes = [8, 64], strides = [1, 1]} : vector<8x128xf32> to vector<8x64xf32>
    %25 = vector.extract_strided_slice %12 {offsets = [0, 128], sizes = [8, 64], strides = [1, 1]} : vector<8x192xf32> to vector<8x64xf32>
    %26 = vector.extract_strided_slice %14 {offsets = [0, 128], sizes = [8, 64], strides = [1, 1]} : vector<8x192xf32> to vector<8x64xf32>
    %27 = arith.addf %26, %10 : vector<8x64xf32>
    %28 = arith.mulf %23, %27 : vector<8x64xf32>
    %29 = arith.addf %25, %28 : vector<8x64xf32>
    %30 = math.tanh %29 : vector<8x64xf32>
    %31 = arith.subf %11, %30 : vector<8x64xf32>
    %32 = arith.mulf %24, %31 : vector<8x64xf32>
    %33 = arith.addf %30, %32 : vector<8x64xf32>
    %c0_14 = arith.constant 0 : index
    %c0_15 = arith.constant 0 : index
    %34 = vector.load %arg1[%c0_14, %c0_15] : memref<64x64xf32, #tpu.memory_space<vmem>>, vector<8x64xf32>
    %cst_16 = arith.constant 5.000000e-01 : f32
    %35 = vector.broadcast %cst_16 : f32 to vector<8x64xf32>
    %36 = arith.cmpf ogt, %34, %35 : vector<8x64xf32>
    %37 = arith.select %36, %33, %11 : vector<8x64xi1>, vector<8x64xf32>
    %c0_17 = arith.constant 0 : index
    %c0_18 = arith.constant 0 : index
    %38 = vector.load %arg9[%c0_17, %c0_18] : memref<64x64xf32, #tpu.memory_space<vmem>>, vector<8x64xf32>
    tpu.vector_store %arg9[%c0_17, %c0_18], %37 {strides = array<i32>} : memref<64x64xf32, #tpu.memory_space<vmem>>, vector<8x64xf32>,
    %c56 = arith.constant 56 : index
    %c0_19 = arith.constant 0 : index
    %39 = vector.load %arg10[%c56, %c0_19] : memref<64x64xf32, #tpu.memory_space<vmem>>, vector<8x64xf32>
    tpu.vector_store %arg10[%c56, %c0_19], %37 {strides = array<i32>} : memref<64x64xf32, #tpu.memory_space<vmem>>, vector<8x64xf32>,
    %c8 = arith.constant 8 : index
    %c0_20 = arith.constant 0 : index
    %40 = vector.load %arg7[%c8, %c0_20] : memref<64x192xf32, #tpu.memory_space<vmem>>, vector<8x192xf32>
    %41 = arith.truncf %37 : vector<8x64xf32> to vector<8x64xbf16>
    %cst_21 = arith.constant dense<0.000000e+00> : vector<8x192xf32>
    %42 = tpu.matmul %41, %7, %cst_21 {dimension_numbers = #tpu.dot_dimension_numbers<[1], [0], [0], [1], [0, 0, 1, 1], [], []>} : vector<8x64xbf16>, vector<64x192xbf16>, vector<8x192xf32> -> vector<8x192xf32>
    %43 = vector.extract_strided_slice %40 {offsets = [0, 0], sizes = [8, 128], strides = [1, 1]} : vector<8x192xf32> to vector<8x128xf32>
    %44 = vector.extract_strided_slice %42 {offsets = [0, 0], sizes = [8, 128], strides = [1, 1]} : vector<8x192xf32> to vector<8x128xf32>
    %45 = arith.addf %43, %44 : vector<8x128xf32>
    %46 = arith.negf %45 : vector<8x128xf32>
    %47 = math.exp %46 : vector<8x128xf32>
    %cst_22 = arith.constant 1.000000e+00 : f32
    %48 = vector.broadcast %cst_22 : f32 to vector<8x128xf32>
    %49 = arith.addf %48, %47 : vector<8x128xf32>
    %50 = arith.divf %48, %49 : vector<8x128xf32>
    %51 = vector.extract_strided_slice %50 {offsets = [0, 0], sizes = [8, 64], strides = [1, 1]} : vector<8x128xf32> to vector<8x64xf32>
    %52 = vector.extract_strided_slice %50 {offsets = [0, 64], sizes = [8, 64], strides = [1, 1]} : vector<8x128xf32> to vector<8x64xf32>
    %53 = vector.extract_strided_slice %40 {offsets = [0, 128], sizes = [8, 64], strides = [1, 1]} : vector<8x192xf32> to vector<8x64xf32>
    %54 = vector.extract_strided_slice %42 {offsets = [0, 128], sizes = [8, 64], strides = [1, 1]} : vector<8x192xf32> to vector<8x64xf32>
    %55 = arith.addf %54, %10 : vector<8x64xf32>
    %56 = arith.mulf %51, %55 : vector<8x64xf32>
    %57 = arith.addf %53, %56 : vector<8x64xf32>
    %58 = math.tanh %57 : vector<8x64xf32>
    %59 = arith.subf %37, %58 : vector<8x64xf32>
    %60 = arith.mulf %52, %59 : vector<8x64xf32>
    %61 = arith.addf %58, %60 : vector<8x64xf32>
    %c8_23 = arith.constant 8 : index
    %c0_24 = arith.constant 0 : index
    %62 = vector.load %arg1[%c8_23, %c0_24] : memref<64x64xf32, #tpu.memory_space<vmem>>, vector<8x64xf32>
    %cst_25 = arith.constant 5.000000e-01 : f32
    %63 = vector.broadcast %cst_25 : f32 to vector<8x64xf32>
    %64 = arith.cmpf ogt, %62, %63 : vector<8x64xf32>
    %65 = arith.select %64, %61, %37 : vector<8x64xi1>, vector<8x64xf32>
    %c8_26 = arith.constant 8 : index
    %c0_27 = arith.constant 0 : index
    %66 = vector.load %arg9[%c8_26, %c0_27] : memref<64x64xf32, #tpu.memory_space<vmem>>, vector<8x64xf32>
    tpu.vector_store %arg9[%c8_26, %c0_27], %65 {strides = array<i32>} : memref<64x64xf32, #tpu.memory_space<vmem>>, vector<8x64xf32>,
    %c48 = arith.constant 48 : index
    %c0_28 = arith.constant 0 : index
    %67 = vector.load %arg10[%c48, %c0_28] : memref<64x64xf32, #tpu.memory_space<vmem>>, vector<8x64xf32>
    tpu.vector_store %arg10[%c48, %c0_28], %65 {strides = array<i32>} : memref<64x64xf32, #tpu.memory_space<vmem>>, vector<8x64xf32>,
    %c16 = arith.constant 16 : index
    %c0_29 = arith.constant 0 : index
    %68 = vector.load %arg7[%c16, %c0_29] : memref<64x192xf32, #tpu.memory_space<vmem>>, vector<8x192xf32>
    %69 = arith.truncf %65 : vector<8x64xf32> to vector<8x64xbf16>
    %cst_30 = arith.constant dense<0.000000e+00> : vector<8x192xf32>
    %70 = tpu.matmul %69, %7, %cst_30 {dimension_numbers = #tpu.dot_dimension_numbers<[1], [0], [0], [1], [0, 0, 1, 1], [], []>} : vector<8x64xbf16>, vector<64x192xbf16>, vector<8x192xf32> -> vector<8x192xf32>
    %71 = vector.extract_strided_slice %68 {offsets = [0, 0], sizes = [8, 128], strides = [1, 1]} : vector<8x192xf32> to vector<8x128xf32>
    %72 = vector.extract_strided_slice %70 {offsets = [0, 0], sizes = [8, 128], strides = [1, 1]} : vector<8x192xf32> to vector<8x128xf32>
    %73 = arith.addf %71, %72 : vector<8x128xf32>
    %74 = arith.negf %73 : vector<8x128xf32>
    %75 = math.exp %74 : vector<8x128xf32>
    %cst_31 = arith.constant 1.000000e+00 : f32
    %76 = vector.broadcast %cst_31 : f32 to vector<8x128xf32>
    %77 = arith.addf %76, %75 : vector<8x128xf32>
    %78 = arith.divf %76, %77 : vector<8x128xf32>
    %79 = vector.extract_strided_slice %78 {offsets = [0, 0], sizes = [8, 64], strides = [1, 1]} : vector<8x128xf32> to vector<8x64xf32>
    %80 = vector.extract_strided_slice %78 {offsets = [0, 64], sizes = [8, 64], strides = [1, 1]} : vector<8x128xf32> to vector<8x64xf32>
    %81 = vector.extract_strided_slice %68 {offsets = [0, 128], sizes = [8, 64], strides = [1, 1]} : vector<8x192xf32> to vector<8x64xf32>
    %82 = vector.extract_strided_slice %70 {offsets = [0, 128], sizes = [8, 64], strides = [1, 1]} : vector<8x192xf32> to vector<8x64xf32>
    %83 = arith.addf %82, %10 : vector<8x64xf32>
    %84 = arith.mulf %79, %83 : vector<8x64xf32>
    %85 = arith.addf %81, %84 : vector<8x64xf32>
    %86 = math.tanh %85 : vector<8x64xf32>
    %87 = arith.subf %65, %86 : vector<8x64xf32>
    %88 = arith.mulf %80, %87 : vector<8x64xf32>
    %89 = arith.addf %86, %88 : vector<8x64xf32>
    %c16_32 = arith.constant 16 : index
    %c0_33 = arith.constant 0 : index
    %90 = vector.load %arg1[%c16_32, %c0_33] : memref<64x64xf32, #tpu.memory_space<vmem>>, vector<8x64xf32>
    %cst_34 = arith.constant 5.000000e-01 : f32
    %91 = vector.broadcast %cst_34 : f32 to vector<8x64xf32>
    %92 = arith.cmpf ogt, %90, %91 : vector<8x64xf32>
    %93 = arith.select %92, %89, %65 : vector<8x64xi1>, vector<8x64xf32>
    %c16_35 = arith.constant 16 : index
    %c0_36 = arith.constant 0 : index
    %94 = vector.load %arg9[%c16_35, %c0_36] : memref<64x64xf32, #tpu.memory_space<vmem>>, vector<8x64xf32>
    tpu.vector_store %arg9[%c16_35, %c0_36], %93 {strides = array<i32>} : memref<64x64xf32, #tpu.memory_space<vmem>>, vector<8x64xf32>,
    %c40 = arith.constant 40 : index
    %c0_37 = arith.constant 0 : index
    %95 = vector.load %arg10[%c40, %c0_37] : memref<64x64xf32, #tpu.memory_space<vmem>>, vector<8x64xf32>
    tpu.vector_store %arg10[%c40, %c0_37], %93 {strides = array<i32>} : memref<64x64xf32, #tpu.memory_space<vmem>>, vector<8x64xf32>,
    %c24 = arith.constant 24 : index
    %c0_38 = arith.constant 0 : index
    %96 = vector.load %arg7[%c24, %c0_38] : memref<64x192xf32, #tpu.memory_space<vmem>>, vector<8x192xf32>
    %97 = arith.truncf %93 : vector<8x64xf32> to vector<8x64xbf16>
    %cst_39 = arith.constant dense<0.000000e+00> : vector<8x192xf32>
    %98 = tpu.matmul %97, %7, %cst_39 {dimension_numbers = #tpu.dot_dimension_numbers<[1], [0], [0], [1], [0, 0, 1, 1], [], []>} : vector<8x64xbf16>, vector<64x192xbf16>, vector<8x192xf32> -> vector<8x192xf32>
    %99 = vector.extract_strided_slice %96 {offsets = [0, 0], sizes = [8, 128], strides = [1, 1]} : vector<8x192xf32> to vector<8x128xf32>
    %100 = vector.extract_strided_slice %98 {offsets = [0, 0], sizes = [8, 128], strides = [1, 1]} : vector<8x192xf32> to vector<8x128xf32>
    %101 = arith.addf %99, %100 : vector<8x128xf32>
    %102 = arith.negf %101 : vector<8x128xf32>
    %103 = math.exp %102 : vector<8x128xf32>
    %cst_40 = arith.constant 1.000000e+00 : f32
    %104 = vector.broadcast %cst_40 : f32 to vector<8x128xf32>
    %105 = arith.addf %104, %103 : vector<8x128xf32>
    %106 = arith.divf %104, %105 : vector<8x128xf32>
    %107 = vector.extract_strided_slice %106 {offsets = [0, 0], sizes = [8, 64], strides = [1, 1]} : vector<8x128xf32> to vector<8x64xf32>
    %108 = vector.extract_strided_slice %106 {offsets = [0, 64], sizes = [8, 64], strides = [1, 1]} : vector<8x128xf32> to vector<8x64xf32>
    %109 = vector.extract_strided_slice %96 {offsets = [0, 128], sizes = [8, 64], strides = [1, 1]} : vector<8x192xf32> to vector<8x64xf32>
    %110 = vector.extract_strided_slice %98 {offsets = [0, 128], sizes = [8, 64], strides = [1, 1]} : vector<8x192xf32> to vector<8x64xf32>
    %111 = arith.addf %110, %10 : vector<8x64xf32>
    %112 = arith.mulf %107, %111 : vector<8x64xf32>
    %113 = arith.addf %109, %112 : vector<8x64xf32>
    %114 = math.tanh %113 : vector<8x64xf32>
    %115 = arith.subf %93, %114 : vector<8x64xf32>
    %116 = arith.mulf %108, %115 : vector<8x64xf32>
    %117 = arith.addf %114, %116 : vector<8x64xf32>
    %c24_41 = arith.constant 24 : index
    %c0_42 = arith.constant 0 : index
    %118 = vector.load %arg1[%c24_41, %c0_42] : memref<64x64xf32, #tpu.memory_space<vmem>>, vector<8x64xf32>
    %cst_43 = arith.constant 5.000000e-01 : f32
    %119 = vector.broadcast %cst_43 : f32 to vector<8x64xf32>
    %120 = arith.cmpf ogt, %118, %119 : vector<8x64xf32>
    %121 = arith.select %120, %117, %93 : vector<8x64xi1>, vector<8x64xf32>
    %c24_44 = arith.constant 24 : index
    %c0_45 = arith.constant 0 : index
    %122 = vector.load %arg9[%c24_44, %c0_45] : memref<64x64xf32, #tpu.memory_space<vmem>>, vector<8x64xf32>
    tpu.vector_store %arg9[%c24_44, %c0_45], %121 {strides = array<i32>} : memref<64x64xf32, #tpu.memory_space<vmem>>, vector<8x64xf32>,
    %c32_46 = arith.constant 32 : index
    %c0_47 = arith.constant 0 : index
    %123 = vector.load %arg10[%c32_46, %c0_47] : memref<64x64xf32, #tpu.memory_space<vmem>>, vector<8x64xf32>
    tpu.vector_store %arg10[%c32_46, %c0_47], %121 {strides = array<i32>} : memref<64x64xf32, #tpu.memory_space<vmem>>, vector<8x64xf32>,
    %c32_48 = arith.constant 32 : index
    %c0_49 = arith.constant 0 : index
    %124 = vector.load %arg7[%c32_48, %c0_49] : memref<64x192xf32, #tpu.memory_space<vmem>>, vector<8x192xf32>
    %125 = arith.truncf %121 : vector<8x64xf32> to vector<8x64xbf16>
    %cst_50 = arith.constant dense<0.000000e+00> : vector<8x192xf32>
    %126 = tpu.matmul %125, %7, %cst_50 {dimension_numbers = #tpu.dot_dimension_numbers<[1], [0], [0], [1], [0, 0, 1, 1], [], []>} : vector<8x64xbf16>, vector<64x192xbf16>, vector<8x192xf32> -> vector<8x192xf32>
    %127 = vector.extract_strided_slice %124 {offsets = [0, 0], sizes = [8, 128], strides = [1, 1]} : vector<8x192xf32> to vector<8x128xf32>
    %128 = vector.extract_strided_slice %126 {offsets = [0, 0], sizes = [8, 128], strides = [1, 1]} : vector<8x192xf32> to vector<8x128xf32>
    %129 = arith.addf %127, %128 : vector<8x128xf32>
    %130 = arith.negf %129 : vector<8x128xf32>
    %131 = math.exp %130 : vector<8x128xf32>
    %cst_51 = arith.constant 1.000000e+00 : f32
    %132 = vector.broadcast %cst_51 : f32 to vector<8x128xf32>
    %133 = arith.addf %132, %131 : vector<8x128xf32>
    %134 = arith.divf %132, %133 : vector<8x128xf32>
    %135 = vector.extract_strided_slice %134 {offsets = [0, 0], sizes = [8, 64], strides = [1, 1]} : vector<8x128xf32> to vector<8x64xf32>
    %136 = vector.extract_strided_slice %134 {offsets = [0, 64], sizes = [8, 64], strides = [1, 1]} : vector<8x128xf32> to vector<8x64xf32>
    %137 = vector.extract_strided_slice %124 {offsets = [0, 128], sizes = [8, 64], strides = [1, 1]} : vector<8x192xf32> to vector<8x64xf32>
    %138 = vector.extract_strided_slice %126 {offsets = [0, 128], sizes = [8, 64], strides = [1, 1]} : vector<8x192xf32> to vector<8x64xf32>
    %139 = arith.addf %138, %10 : vector<8x64xf32>
    %140 = arith.mulf %135, %139 : vector<8x64xf32>
    %141 = arith.addf %137, %140 : vector<8x64xf32>
    %142 = math.tanh %141 : vector<8x64xf32>
    %143 = arith.subf %121, %142 : vector<8x64xf32>
    %144 = arith.mulf %136, %143 : vector<8x64xf32>
    %145 = arith.addf %142, %144 : vector<8x64xf32>
    %c32_52 = arith.constant 32 : index
    %c0_53 = arith.constant 0 : index
    %146 = vector.load %arg1[%c32_52, %c0_53] : memref<64x64xf32, #tpu.memory_space<vmem>>, vector<8x64xf32>
    %cst_54 = arith.constant 5.000000e-01 : f32
    %147 = vector.broadcast %cst_54 : f32 to vector<8x64xf32>
    %148 = arith.cmpf ogt, %146, %147 : vector<8x64xf32>
    %149 = arith.select %148, %145, %121 : vector<8x64xi1>, vector<8x64xf32>
    %c32_55 = arith.constant 32 : index
    %c0_56 = arith.constant 0 : index
    %150 = vector.load %arg9[%c32_55, %c0_56] : memref<64x64xf32, #tpu.memory_space<vmem>>, vector<8x64xf32>
    tpu.vector_store %arg9[%c32_55, %c0_56], %149 {strides = array<i32>} : memref<64x64xf32, #tpu.memory_space<vmem>>, vector<8x64xf32>,
    %c24_57 = arith.constant 24 : index
    %c0_58 = arith.constant 0 : index
    %151 = vector.load %arg10[%c24_57, %c0_58] : memref<64x64xf32, #tpu.memory_space<vmem>>, vector<8x64xf32>
    tpu.vector_store %arg10[%c24_57, %c0_58], %149 {strides = array<i32>} : memref<64x64xf32, #tpu.memory_space<vmem>>, vector<8x64xf32>,
    %c40_59 = arith.constant 40 : index
    %c0_60 = arith.constant 0 : index
    %152 = vector.load %arg7[%c40_59, %c0_60] : memref<64x192xf32, #tpu.memory_space<vmem>>, vector<8x192xf32>
    %153 = arith.truncf %149 : vector<8x64xf32> to vector<8x64xbf16>
    %cst_61 = arith.constant dense<0.000000e+00> : vector<8x192xf32>
    %154 = tpu.matmul %153, %7, %cst_61 {dimension_numbers = #tpu.dot_dimension_numbers<[1], [0], [0], [1], [0, 0, 1, 1], [], []>} : vector<8x64xbf16>, vector<64x192xbf16>, vector<8x192xf32> -> vector<8x192xf32>
    %155 = vector.extract_strided_slice %152 {offsets = [0, 0], sizes = [8, 128], strides = [1, 1]} : vector<8x192xf32> to vector<8x128xf32>
    %156 = vector.extract_strided_slice %154 {offsets = [0, 0], sizes = [8, 128], strides = [1, 1]} : vector<8x192xf32> to vector<8x128xf32>
    %157 = arith.addf %155, %156 : vector<8x128xf32>
    %158 = arith.negf %157 : vector<8x128xf32>
    %159 = math.exp %158 : vector<8x128xf32>
    %cst_62 = arith.constant 1.000000e+00 : f32
    %160 = vector.broadcast %cst_62 : f32 to vector<8x128xf32>
    %161 = arith.addf %160, %159 : vector<8x128xf32>
    %162 = arith.divf %160, %161 : vector<8x128xf32>
    %163 = vector.extract_strided_slice %162 {offsets = [0, 0], sizes = [8, 64], strides = [1, 1]} : vector<8x128xf32> to vector<8x64xf32>
    %164 = vector.extract_strided_slice %162 {offsets = [0, 64], sizes = [8, 64], strides = [1, 1]} : vector<8x128xf32> to vector<8x64xf32>
    %165 = vector.extract_strided_slice %152 {offsets = [0, 128], sizes = [8, 64], strides = [1, 1]} : vector<8x192xf32> to vector<8x64xf32>
    %166 = vector.extract_strided_slice %154 {offsets = [0, 128], sizes = [8, 64], strides = [1, 1]} : vector<8x192xf32> to vector<8x64xf32>
    %167 = arith.addf %166, %10 : vector<8x64xf32>
    %168 = arith.mulf %163, %167 : vector<8x64xf32>
    %169 = arith.addf %165, %168 : vector<8x64xf32>
    %170 = math.tanh %169 : vector<8x64xf32>
    %171 = arith.subf %149, %170 : vector<8x64xf32>
    %172 = arith.mulf %164, %171 : vector<8x64xf32>
    %173 = arith.addf %170, %172 : vector<8x64xf32>
    %c40_63 = arith.constant 40 : index
    %c0_64 = arith.constant 0 : index
    %174 = vector.load %arg1[%c40_63, %c0_64] : memref<64x64xf32, #tpu.memory_space<vmem>>, vector<8x64xf32>
    %cst_65 = arith.constant 5.000000e-01 : f32
    %175 = vector.broadcast %cst_65 : f32 to vector<8x64xf32>
    %176 = arith.cmpf ogt, %174, %175 : vector<8x64xf32>
    %177 = arith.select %176, %173, %149 : vector<8x64xi1>, vector<8x64xf32>
    %c40_66 = arith.constant 40 : index
    %c0_67 = arith.constant 0 : index
    %178 = vector.load %arg9[%c40_66, %c0_67] : memref<64x64xf32, #tpu.memory_space<vmem>>, vector<8x64xf32>
    tpu.vector_store %arg9[%c40_66, %c0_67], %177 {strides = array<i32>} : memref<64x64xf32, #tpu.memory_space<vmem>>, vector<8x64xf32>,
    %c16_68 = arith.constant 16 : index
    %c0_69 = arith.constant 0 : index
    %179 = vector.load %arg10[%c16_68, %c0_69] : memref<64x64xf32, #tpu.memory_space<vmem>>, vector<8x64xf32>
    tpu.vector_store %arg10[%c16_68, %c0_69], %177 {strides = array<i32>} : memref<64x64xf32, #tpu.memory_space<vmem>>, vector<8x64xf32>,
    %c48_70 = arith.constant 48 : index
    %c0_71 = arith.constant 0 : index
    %180 = vector.load %arg7[%c48_70, %c0_71] : memref<64x192xf32, #tpu.memory_space<vmem>>, vector<8x192xf32>
    %181 = arith.truncf %177 : vector<8x64xf32> to vector<8x64xbf16>
    %cst_72 = arith.constant dense<0.000000e+00> : vector<8x192xf32>
    %182 = tpu.matmul %181, %7, %cst_72 {dimension_numbers = #tpu.dot_dimension_numbers<[1], [0], [0], [1], [0, 0, 1, 1], [], []>} : vector<8x64xbf16>, vector<64x192xbf16>, vector<8x192xf32> -> vector<8x192xf32>
    %183 = vector.extract_strided_slice %180 {offsets = [0, 0], sizes = [8, 128], strides = [1, 1]} : vector<8x192xf32> to vector<8x128xf32>
    %184 = vector.extract_strided_slice %182 {offsets = [0, 0], sizes = [8, 128], strides = [1, 1]} : vector<8x192xf32> to vector<8x128xf32>
    %185 = arith.addf %183, %184 : vector<8x128xf32>
    %186 = arith.negf %185 : vector<8x128xf32>
    %187 = math.exp %186 : vector<8x128xf32>
    %cst_73 = arith.constant 1.000000e+00 : f32
    %188 = vector.broadcast %cst_73 : f32 to vector<8x128xf32>
    %189 = arith.addf %188, %187 : vector<8x128xf32>
    %190 = arith.divf %188, %189 : vector<8x128xf32>
    %191 = vector.extract_strided_slice %190 {offsets = [0, 0], sizes = [8, 64], strides = [1, 1]} : vector<8x128xf32> to vector<8x64xf32>
    %192 = vector.extract_strided_slice %190 {offsets = [0, 64], sizes = [8, 64], strides = [1, 1]} : vector<8x128xf32> to vector<8x64xf32>
    %193 = vector.extract_strided_slice %180 {offsets = [0, 128], sizes = [8, 64], strides = [1, 1]} : vector<8x192xf32> to vector<8x64xf32>
    %194 = vector.extract_strided_slice %182 {offsets = [0, 128], sizes = [8, 64], strides = [1, 1]} : vector<8x192xf32> to vector<8x64xf32>
    %195 = arith.addf %194, %10 : vector<8x64xf32>
    %196 = arith.mulf %191, %195 : vector<8x64xf32>
    %197 = arith.addf %193, %196 : vector<8x64xf32>
    %198 = math.tanh %197 : vector<8x64xf32>
    %199 = arith.subf %177, %198 : vector<8x64xf32>
    %200 = arith.mulf %192, %199 : vector<8x64xf32>
    %201 = arith.addf %198, %200 : vector<8x64xf32>
    %c48_74 = arith.constant 48 : index
    %c0_75 = arith.constant 0 : index
    %202 = vector.load %arg1[%c48_74, %c0_75] : memref<64x64xf32, #tpu.memory_space<vmem>>, vector<8x64xf32>
    %cst_76 = arith.constant 5.000000e-01 : f32
    %203 = vector.broadcast %cst_76 : f32 to vector<8x64xf32>
    %204 = arith.cmpf ogt, %202, %203 : vector<8x64xf32>
    %205 = arith.select %204, %201, %177 : vector<8x64xi1>, vector<8x64xf32>
    %c48_77 = arith.constant 48 : index
    %c0_78 = arith.constant 0 : index
    %206 = vector.load %arg9[%c48_77, %c0_78] : memref<64x64xf32, #tpu.memory_space<vmem>>, vector<8x64xf32>
    tpu.vector_store %arg9[%c48_77, %c0_78], %205 {strides = array<i32>} : memref<64x64xf32, #tpu.memory_space<vmem>>, vector<8x64xf32>,
    %c8_79 = arith.constant 8 : index
    %c0_80 = arith.constant 0 : index
    %207 = vector.load %arg10[%c8_79, %c0_80] : memref<64x64xf32, #tpu.memory_space<vmem>>, vector<8x64xf32>
    tpu.vector_store %arg10[%c8_79, %c0_80], %205 {strides = array<i32>} : memref<64x64xf32, #tpu.memory_space<vmem>>, vector<8x64xf32>,
    %c56_81 = arith.constant 56 : index
    %c0_82 = arith.constant 0 : index
    %208 = vector.load %arg7[%c56_81, %c0_82] : memref<64x192xf32, #tpu.memory_space<vmem>>, vector<8x192xf32>
    %209 = arith.truncf %205 : vector<8x64xf32> to vector<8x64xbf16>
    %cst_83 = arith.constant dense<0.000000e+00> : vector<8x192xf32>
    %210 = tpu.matmul %209, %7, %cst_83 {dimension_numbers = #tpu.dot_dimension_numbers<[1], [0], [0], [1], [0, 0, 1, 1], [], []>} : vector<8x64xbf16>, vector<64x192xbf16>, vector<8x192xf32> -> vector<8x192xf32>
    %211 = vector.extract_strided_slice %208 {offsets = [0, 0], sizes = [8, 128], strides = [1, 1]} : vector<8x192xf32> to vector<8x128xf32>
    %212 = vector.extract_strided_slice %210 {offsets = [0, 0], sizes = [8, 128], strides = [1, 1]} : vector<8x192xf32> to vector<8x128xf32>
    %213 = arith.addf %211, %212 : vector<8x128xf32>
    %214 = arith.negf %213 : vector<8x128xf32>
    %215 = math.exp %214 : vector<8x128xf32>
    %cst_84 = arith.constant 1.000000e+00 : f32
    %216 = vector.broadcast %cst_84 : f32 to vector<8x128xf32>
    %217 = arith.addf %216, %215 : vector<8x128xf32>
    %218 = arith.divf %216, %217 : vector<8x128xf32>
    %219 = vector.extract_strided_slice %218 {offsets = [0, 0], sizes = [8, 64], strides = [1, 1]} : vector<8x128xf32> to vector<8x64xf32>
    %220 = vector.extract_strided_slice %218 {offsets = [0, 64], sizes = [8, 64], strides = [1, 1]} : vector<8x128xf32> to vector<8x64xf32>
    %221 = vector.extract_strided_slice %208 {offsets = [0, 128], sizes = [8, 64], strides = [1, 1]} : vector<8x192xf32> to vector<8x64xf32>
    %222 = vector.extract_strided_slice %210 {offsets = [0, 128], sizes = [8, 64], strides = [1, 1]} : vector<8x192xf32> to vector<8x64xf32>
    %223 = arith.addf %222, %10 : vector<8x64xf32>
    %224 = arith.mulf %219, %223 : vector<8x64xf32>
    %225 = arith.addf %221, %224 : vector<8x64xf32>
    %226 = math.tanh %225 : vector<8x64xf32>
    %227 = arith.subf %205, %226 : vector<8x64xf32>
    %228 = arith.mulf %220, %227 : vector<8x64xf32>
    %229 = arith.addf %226, %228 : vector<8x64xf32>
    %c56_85 = arith.constant 56 : index
    %c0_86 = arith.constant 0 : index
    %230 = vector.load %arg1[%c56_85, %c0_86] : memref<64x64xf32, #tpu.memory_space<vmem>>, vector<8x64xf32>
    %cst_87 = arith.constant 5.000000e-01 : f32
    %231 = vector.broadcast %cst_87 : f32 to vector<8x64xf32>
    %232 = arith.cmpf ogt, %230, %231 : vector<8x64xf32>
    %233 = arith.select %232, %229, %205 : vector<8x64xi1>, vector<8x64xf32>
    %c56_88 = arith.constant 56 : index
    %c0_89 = arith.constant 0 : index
    %234 = vector.load %arg9[%c56_88, %c0_89] : memref<64x64xf32, #tpu.memory_space<vmem>>, vector<8x64xf32>
    tpu.vector_store %arg9[%c56_88, %c0_89], %233 {strides = array<i32>} : memref<64x64xf32, #tpu.memory_space<vmem>>, vector<8x64xf32>,
    %c0_90 = arith.constant 0 : index
    %c0_91 = arith.constant 0 : index
    %235 = vector.load %arg10[%c0_90, %c0_91] : memref<64x64xf32, #tpu.memory_space<vmem>>, vector<8x64xf32>
    tpu.vector_store %arg10[%c0_90, %c0_91], %233 {strides = array<i32>} : memref<64x64xf32, #tpu.memory_space<vmem>>, vector<8x64xf32>,
    %c0_92 = arith.constant 0 : index
    %c0_93 = arith.constant 0 : index
    %236 = vector.load %arg9[%c0_92, %c0_93] : memref<64x64xf32, #tpu.memory_space<vmem>>, vector<64x64xf32>
    %237 = arith.truncf %236 : vector<64x64xf32> to vector<64x64xbf16>
    %c96 = arith.constant 96 : index
    %c0_94 = arith.constant 0 : index
    %238 = vector.load %arg2[%c96, %c0_94] : memref<288x192xbf16, #tpu.memory_space<vmem>>, vector<64x192xbf16>
    %cst_95 = arith.constant dense<0.000000e+00> : vector<64x192xf32>
    %239 = tpu.matmul %237, %238, %cst_95 {dimension_numbers = #tpu.dot_dimension_numbers<[1], [0], [0], [1], [0, 0, 1, 1], [], []>} : vector<64x64xbf16>, vector<64x192xbf16>, vector<64x192xf32> -> vector<64x192xf32>
    %c0_96 = arith.constant 0 : index
    %c0_97 = arith.constant 0 : index
    %240 = vector.load %arg10[%c0_96, %c0_97] : memref<64x64xf32, #tpu.memory_space<vmem>>, vector<64x64xf32>
    %241 = arith.truncf %240 : vector<64x64xf32> to vector<64x64xbf16>
    %c160 = arith.constant 160 : index
    %c0_98 = arith.constant 0 : index
    %242 = vector.load %arg2[%c160, %c0_98] : memref<288x192xbf16, #tpu.memory_space<vmem>>, vector<64x192xbf16>
    %cst_99 = arith.constant dense<0.000000e+00> : vector<64x192xf32>
    %243 = tpu.matmul %241, %242, %cst_99 {dimension_numbers = #tpu.dot_dimension_numbers<[1], [0], [0], [1], [0, 0, 1, 1], [], []>} : vector<64x64xbf16>, vector<64x192xbf16>, vector<64x192xf32> -> vector<64x192xf32>
    %244 = arith.addf %239, %243 : vector<64x192xf32>
    %c1 = arith.constant 1 : index
    %c0_100 = arith.constant 0 : index
    %245 = vector.load %arg3[%c1, %c0_100] : memref<4x192xf32, #tpu.memory_space<vmem>>, vector<1x192xf32>
    %246 = vector.broadcast %245 : vector<1x192xf32> to vector<64x192xf32>
    %247 = arith.addf %244, %246 : vector<64x192xf32>
    %c0_101 = arith.constant 0 : index
    %c0_102 = arith.constant 0 : index
    %248 = vector.load %arg8[%c0_101, %c0_102] : memref<64x192xf32, #tpu.memory_space<vmem>>, vector<64x192xf32>
    tpu.vector_store %arg8[%c0_101, %c0_102], %247 {strides = array<i32>} : memref<64x192xf32, #tpu.memory_space<vmem>>, vector<64x192xf32>,
    %c224 = arith.constant 224 : index
    %c0_103 = arith.constant 0 : index
    %249 = vector.load %arg2[%c224, %c0_103] : memref<288x192xbf16, #tpu.memory_space<vmem>>, vector<64x192xbf16>
    %c3 = arith.constant 3 : index
    %c0_104 = arith.constant 0 : index
    %250 = vector.load %arg3[%c3, %c0_104] : memref<4x192xf32, #tpu.memory_space<vmem>>, vector<1x64xf32>
    %251 = vector.shape_cast %250 : vector<1x64xf32> to vector<1x64xf32>
    %252 = vector.broadcast %251 : vector<1x64xf32> to vector<8x64xf32>
    %cst_105 = arith.constant 0.000000e+00 : f32
    %253 = vector.broadcast %cst_105 : f32 to vector<8x64xf32>
    %c0_106 = arith.constant 0 : index
    %c0_107 = arith.constant 0 : index
    %254 = vector.load %arg8[%c0_106, %c0_107] : memref<64x192xf32, #tpu.memory_space<vmem>>, vector<8x192xf32>
    %255 = arith.truncf %253 : vector<8x64xf32> to vector<8x64xbf16>
    %cst_108 = arith.constant dense<0.000000e+00> : vector<8x192xf32>
    %256 = tpu.matmul %255, %249, %cst_108 {dimension_numbers = #tpu.dot_dimension_numbers<[1], [0], [0], [1], [0, 0, 1, 1], [], []>} : vector<8x64xbf16>, vector<64x192xbf16>, vector<8x192xf32> -> vector<8x192xf32>
    %257 = vector.extract_strided_slice %254 {offsets = [0, 0], sizes = [8, 128], strides = [1, 1]} : vector<8x192xf32> to vector<8x128xf32>
    %258 = vector.extract_strided_slice %256 {offsets = [0, 0], sizes = [8, 128], strides = [1, 1]} : vector<8x192xf32> to vector<8x128xf32>
    %259 = arith.addf %257, %258 : vector<8x128xf32>
    %260 = arith.negf %259 : vector<8x128xf32>
    %261 = math.exp %260 : vector<8x128xf32>
    %cst_109 = arith.constant 1.000000e+00 : f32
    %262 = vector.broadcast %cst_109 : f32 to vector<8x128xf32>
    %263 = arith.addf %262, %261 : vector<8x128xf32>
    %264 = arith.divf %262, %263 : vector<8x128xf32>
    %265 = vector.extract_strided_slice %264 {offsets = [0, 0], sizes = [8, 64], strides = [1, 1]} : vector<8x128xf32> to vector<8x64xf32>
    %266 = vector.extract_strided_slice %264 {offsets = [0, 64], sizes = [8, 64], strides = [1, 1]} : vector<8x128xf32> to vector<8x64xf32>
    %267 = vector.extract_strided_slice %254 {offsets = [0, 128], sizes = [8, 64], strides = [1, 1]} : vector<8x192xf32> to vector<8x64xf32>
    %268 = vector.extract_strided_slice %256 {offsets = [0, 128], sizes = [8, 64], strides = [1, 1]} : vector<8x192xf32> to vector<8x64xf32>
    %269 = arith.addf %268, %252 : vector<8x64xf32>
    %270 = arith.mulf %265, %269 : vector<8x64xf32>
    %271 = arith.addf %267, %270 : vector<8x64xf32>
    %272 = math.tanh %271 : vector<8x64xf32>
    %273 = arith.subf %253, %272 : vector<8x64xf32>
    %274 = arith.mulf %266, %273 : vector<8x64xf32>
    %275 = arith.addf %272, %274 : vector<8x64xf32>
    %c0_110 = arith.constant 0 : index
    %c0_111 = arith.constant 0 : index
    %276 = vector.load %arg1[%c0_110, %c0_111] : memref<64x64xf32, #tpu.memory_space<vmem>>, vector<8x64xf32>
    %cst_112 = arith.constant 5.000000e-01 : f32
    %277 = vector.broadcast %cst_112 : f32 to vector<8x64xf32>
    %278 = arith.cmpf ogt, %276, %277 : vector<8x64xf32>
    %279 = arith.select %278, %275, %253 : vector<8x64xi1>, vector<8x64xf32>
    %c8_113 = arith.constant 8 : index
    %c0_114 = arith.constant 0 : index
    %280 = vector.load %arg8[%c8_113, %c0_114] : memref<64x192xf32, #tpu.memory_space<vmem>>, vector<8x192xf32>
    %281 = arith.truncf %279 : vector<8x64xf32> to vector<8x64xbf16>
    %cst_115 = arith.constant dense<0.000000e+00> : vector<8x192xf32>
    %282 = tpu.matmul %281, %249, %cst_115 {dimension_numbers = #tpu.dot_dimension_numbers<[1], [0], [0], [1], [0, 0, 1, 1], [], []>} : vector<8x64xbf16>, vector<64x192xbf16>, vector<8x192xf32> -> vector<8x192xf32>
    %283 = vector.extract_strided_slice %280 {offsets = [0, 0], sizes = [8, 128], strides = [1, 1]} : vector<8x192xf32> to vector<8x128xf32>
    %284 = vector.extract_strided_slice %282 {offsets = [0, 0], sizes = [8, 128], strides = [1, 1]} : vector<8x192xf32> to vector<8x128xf32>
    %285 = arith.addf %283, %284 : vector<8x128xf32>
    %286 = arith.negf %285 : vector<8x128xf32>
    %287 = math.exp %286 : vector<8x128xf32>
    %cst_116 = arith.constant 1.000000e+00 : f32
    %288 = vector.broadcast %cst_116 : f32 to vector<8x128xf32>
    %289 = arith.addf %288, %287 : vector<8x128xf32>
    %290 = arith.divf %288, %289 : vector<8x128xf32>
    %291 = vector.extract_strided_slice %290 {offsets = [0, 0], sizes = [8, 64], strides = [1, 1]} : vector<8x128xf32> to vector<8x64xf32>
    %292 = vector.extract_strided_slice %290 {offsets = [0, 64], sizes = [8, 64], strides = [1, 1]} : vector<8x128xf32> to vector<8x64xf32>
    %293 = vector.extract_strided_slice %280 {offsets = [0, 128], sizes = [8, 64], strides = [1, 1]} : vector<8x192xf32> to vector<8x64xf32>
    %294 = vector.extract_strided_slice %282 {offsets = [0, 128], sizes = [8, 64], strides = [1, 1]} : vector<8x192xf32> to vector<8x64xf32>
    %295 = arith.addf %294, %252 : vector<8x64xf32>
    %296 = arith.mulf %291, %295 : vector<8x64xf32>
    %297 = arith.addf %293, %296 : vector<8x64xf32>
    %298 = math.tanh %297 : vector<8x64xf32>
    %299 = arith.subf %279, %298 : vector<8x64xf32>
    %300 = arith.mulf %292, %299 : vector<8x64xf32>
    %301 = arith.addf %298, %300 : vector<8x64xf32>
    %c8_117 = arith.constant 8 : index
    %c0_118 = arith.constant 0 : index
    %302 = vector.load %arg1[%c8_117, %c0_118] : memref<64x64xf32, #tpu.memory_space<vmem>>, vector<8x64xf32>
    %cst_119 = arith.constant 5.000000e-01 : f32
    %303 = vector.broadcast %cst_119 : f32 to vector<8x64xf32>
    %304 = arith.cmpf ogt, %302, %303 : vector<8x64xf32>
    %305 = arith.select %304, %301, %279 : vector<8x64xi1>, vector<8x64xf32>
    %c16_120 = arith.constant 16 : index
    %c0_121 = arith.constant 0 : index
    %306 = vector.load %arg8[%c16_120, %c0_121] : memref<64x192xf32, #tpu.memory_space<vmem>>, vector<8x192xf32>
    %307 = arith.truncf %305 : vector<8x64xf32> to vector<8x64xbf16>
    %cst_122 = arith.constant dense<0.000000e+00> : vector<8x192xf32>
    %308 = tpu.matmul %307, %249, %cst_122 {dimension_numbers = #tpu.dot_dimension_numbers<[1], [0], [0], [1], [0, 0, 1, 1], [], []>} : vector<8x64xbf16>, vector<64x192xbf16>, vector<8x192xf32> -> vector<8x192xf32>
    %309 = vector.extract_strided_slice %306 {offsets = [0, 0], sizes = [8, 128], strides = [1, 1]} : vector<8x192xf32> to vector<8x128xf32>
    %310 = vector.extract_strided_slice %308 {offsets = [0, 0], sizes = [8, 128], strides = [1, 1]} : vector<8x192xf32> to vector<8x128xf32>
    %311 = arith.addf %309, %310 : vector<8x128xf32>
    %312 = arith.negf %311 : vector<8x128xf32>
    %313 = math.exp %312 : vector<8x128xf32>
    %cst_123 = arith.constant 1.000000e+00 : f32
    %314 = vector.broadcast %cst_123 : f32 to vector<8x128xf32>
    %315 = arith.addf %314, %313 : vector<8x128xf32>
    %316 = arith.divf %314, %315 : vector<8x128xf32>
    %317 = vector.extract_strided_slice %316 {offsets = [0, 0], sizes = [8, 64], strides = [1, 1]} : vector<8x128xf32> to vector<8x64xf32>
    %318 = vector.extract_strided_slice %316 {offsets = [0, 64], sizes = [8, 64], strides = [1, 1]} : vector<8x128xf32> to vector<8x64xf32>
    %319 = vector.extract_strided_slice %306 {offsets = [0, 128], sizes = [8, 64], strides = [1, 1]} : vector<8x192xf32> to vector<8x64xf32>
    %320 = vector.extract_strided_slice %308 {offsets = [0, 128], sizes = [8, 64], strides = [1, 1]} : vector<8x192xf32> to vector<8x64xf32>
    %321 = arith.addf %320, %252 : vector<8x64xf32>
    %322 = arith.mulf %317, %321 : vector<8x64xf32>
    %323 = arith.addf %319, %322 : vector<8x64xf32>
    %324 = math.tanh %323 : vector<8x64xf32>
    %325 = arith.subf %305, %324 : vector<8x64xf32>
    %326 = arith.mulf %318, %325 : vector<8x64xf32>
    %327 = arith.addf %324, %326 : vector<8x64xf32>
    %c16_124 = arith.constant 16 : index
    %c0_125 = arith.constant 0 : index
    %328 = vector.load %arg1[%c16_124, %c0_125] : memref<64x64xf32, #tpu.memory_space<vmem>>, vector<8x64xf32>
    %cst_126 = arith.constant 5.000000e-01 : f32
    %329 = vector.broadcast %cst_126 : f32 to vector<8x64xf32>
    %330 = arith.cmpf ogt, %328, %329 : vector<8x64xf32>
    %331 = arith.select %330, %327, %305 : vector<8x64xi1>, vector<8x64xf32>
    %c24_127 = arith.constant 24 : index
    %c0_128 = arith.constant 0 : index
    %332 = vector.load %arg8[%c24_127, %c0_128] : memref<64x192xf32, #tpu.memory_space<vmem>>, vector<8x192xf32>
    %333 = arith.truncf %331 : vector<8x64xf32> to vector<8x64xbf16>
    %cst_129 = arith.constant dense<0.000000e+00> : vector<8x192xf32>
    %334 = tpu.matmul %333, %249, %cst_129 {dimension_numbers = #tpu.dot_dimension_numbers<[1], [0], [0], [1], [0, 0, 1, 1], [], []>} : vector<8x64xbf16>, vector<64x192xbf16>, vector<8x192xf32> -> vector<8x192xf32>
    %335 = vector.extract_strided_slice %332 {offsets = [0, 0], sizes = [8, 128], strides = [1, 1]} : vector<8x192xf32> to vector<8x128xf32>
    %336 = vector.extract_strided_slice %334 {offsets = [0, 0], sizes = [8, 128], strides = [1, 1]} : vector<8x192xf32> to vector<8x128xf32>
    %337 = arith.addf %335, %336 : vector<8x128xf32>
    %338 = arith.negf %337 : vector<8x128xf32>
    %339 = math.exp %338 : vector<8x128xf32>
    %cst_130 = arith.constant 1.000000e+00 : f32
    %340 = vector.broadcast %cst_130 : f32 to vector<8x128xf32>
    %341 = arith.addf %340, %339 : vector<8x128xf32>
    %342 = arith.divf %340, %341 : vector<8x128xf32>
    %343 = vector.extract_strided_slice %342 {offsets = [0, 0], sizes = [8, 64], strides = [1, 1]} : vector<8x128xf32> to vector<8x64xf32>
    %344 = vector.extract_strided_slice %342 {offsets = [0, 64], sizes = [8, 64], strides = [1, 1]} : vector<8x128xf32> to vector<8x64xf32>
    %345 = vector.extract_strided_slice %332 {offsets = [0, 128], sizes = [8, 64], strides = [1, 1]} : vector<8x192xf32> to vector<8x64xf32>
    %346 = vector.extract_strided_slice %334 {offsets = [0, 128], sizes = [8, 64], strides = [1, 1]} : vector<8x192xf32> to vector<8x64xf32>
    %347 = arith.addf %346, %252 : vector<8x64xf32>
    %348 = arith.mulf %343, %347 : vector<8x64xf32>
    %349 = arith.addf %345, %348 : vector<8x64xf32>
    %350 = math.tanh %349 : vector<8x64xf32>
    %351 = arith.subf %331, %350 : vector<8x64xf32>
    %352 = arith.mulf %344, %351 : vector<8x64xf32>
    %353 = arith.addf %350, %352 : vector<8x64xf32>
    %c24_131 = arith.constant 24 : index
    %c0_132 = arith.constant 0 : index
    %354 = vector.load %arg1[%c24_131, %c0_132] : memref<64x64xf32, #tpu.memory_space<vmem>>, vector<8x64xf32>
    %cst_133 = arith.constant 5.000000e-01 : f32
    %355 = vector.broadcast %cst_133 : f32 to vector<8x64xf32>
    %356 = arith.cmpf ogt, %354, %355 : vector<8x64xf32>
    %357 = arith.select %356, %353, %331 : vector<8x64xi1>, vector<8x64xf32>
    %c32_134 = arith.constant 32 : index
    %c0_135 = arith.constant 0 : index
    %358 = vector.load %arg8[%c32_134, %c0_135] : memref<64x192xf32, #tpu.memory_space<vmem>>, vector<8x192xf32>
    %359 = arith.truncf %357 : vector<8x64xf32> to vector<8x64xbf16>
    %cst_136 = arith.constant dense<0.000000e+00> : vector<8x192xf32>
    %360 = tpu.matmul %359, %249, %cst_136 {dimension_numbers = #tpu.dot_dimension_numbers<[1], [0], [0], [1], [0, 0, 1, 1], [], []>} : vector<8x64xbf16>, vector<64x192xbf16>, vector<8x192xf32> -> vector<8x192xf32>
    %361 = vector.extract_strided_slice %358 {offsets = [0, 0], sizes = [8, 128], strides = [1, 1]} : vector<8x192xf32> to vector<8x128xf32>
    %362 = vector.extract_strided_slice %360 {offsets = [0, 0], sizes = [8, 128], strides = [1, 1]} : vector<8x192xf32> to vector<8x128xf32>
    %363 = arith.addf %361, %362 : vector<8x128xf32>
    %364 = arith.negf %363 : vector<8x128xf32>
    %365 = math.exp %364 : vector<8x128xf32>
    %cst_137 = arith.constant 1.000000e+00 : f32
    %366 = vector.broadcast %cst_137 : f32 to vector<8x128xf32>
    %367 = arith.addf %366, %365 : vector<8x128xf32>
    %368 = arith.divf %366, %367 : vector<8x128xf32>
    %369 = vector.extract_strided_slice %368 {offsets = [0, 0], sizes = [8, 64], strides = [1, 1]} : vector<8x128xf32> to vector<8x64xf32>
    %370 = vector.extract_strided_slice %368 {offsets = [0, 64], sizes = [8, 64], strides = [1, 1]} : vector<8x128xf32> to vector<8x64xf32>
    %371 = vector.extract_strided_slice %358 {offsets = [0, 128], sizes = [8, 64], strides = [1, 1]} : vector<8x192xf32> to vector<8x64xf32>
    %372 = vector.extract_strided_slice %360 {offsets = [0, 128], sizes = [8, 64], strides = [1, 1]} : vector<8x192xf32> to vector<8x64xf32>
    %373 = arith.addf %372, %252 : vector<8x64xf32>
    %374 = arith.mulf %369, %373 : vector<8x64xf32>
    %375 = arith.addf %371, %374 : vector<8x64xf32>
    %376 = math.tanh %375 : vector<8x64xf32>
    %377 = arith.subf %357, %376 : vector<8x64xf32>
    %378 = arith.mulf %370, %377 : vector<8x64xf32>
    %379 = arith.addf %376, %378 : vector<8x64xf32>
    %c32_138 = arith.constant 32 : index
    %c0_139 = arith.constant 0 : index
    %380 = vector.load %arg1[%c32_138, %c0_139] : memref<64x64xf32, #tpu.memory_space<vmem>>, vector<8x64xf32>
    %cst_140 = arith.constant 5.000000e-01 : f32
    %381 = vector.broadcast %cst_140 : f32 to vector<8x64xf32>
    %382 = arith.cmpf ogt, %380, %381 : vector<8x64xf32>
    %383 = arith.select %382, %379, %357 : vector<8x64xi1>, vector<8x64xf32>
    %c40_141 = arith.constant 40 : index
    %c0_142 = arith.constant 0 : index
    %384 = vector.load %arg8[%c40_141, %c0_142] : memref<64x192xf32, #tpu.memory_space<vmem>>, vector<8x192xf32>
    %385 = arith.truncf %383 : vector<8x64xf32> to vector<8x64xbf16>
    %cst_143 = arith.constant dense<0.000000e+00> : vector<8x192xf32>
    %386 = tpu.matmul %385, %249, %cst_143 {dimension_numbers = #tpu.dot_dimension_numbers<[1], [0], [0], [1], [0, 0, 1, 1], [], []>} : vector<8x64xbf16>, vector<64x192xbf16>, vector<8x192xf32> -> vector<8x192xf32>
    %387 = vector.extract_strided_slice %384 {offsets = [0, 0], sizes = [8, 128], strides = [1, 1]} : vector<8x192xf32> to vector<8x128xf32>
    %388 = vector.extract_strided_slice %386 {offsets = [0, 0], sizes = [8, 128], strides = [1, 1]} : vector<8x192xf32> to vector<8x128xf32>
    %389 = arith.addf %387, %388 : vector<8x128xf32>
    %390 = arith.negf %389 : vector<8x128xf32>
    %391 = math.exp %390 : vector<8x128xf32>
    %cst_144 = arith.constant 1.000000e+00 : f32
    %392 = vector.broadcast %cst_144 : f32 to vector<8x128xf32>
    %393 = arith.addf %392, %391 : vector<8x128xf32>
    %394 = arith.divf %392, %393 : vector<8x128xf32>
    %395 = vector.extract_strided_slice %394 {offsets = [0, 0], sizes = [8, 64], strides = [1, 1]} : vector<8x128xf32> to vector<8x64xf32>
    %396 = vector.extract_strided_slice %394 {offsets = [0, 64], sizes = [8, 64], strides = [1, 1]} : vector<8x128xf32> to vector<8x64xf32>
    %397 = vector.extract_strided_slice %384 {offsets = [0, 128], sizes = [8, 64], strides = [1, 1]} : vector<8x192xf32> to vector<8x64xf32>
    %398 = vector.extract_strided_slice %386 {offsets = [0, 128], sizes = [8, 64], strides = [1, 1]} : vector<8x192xf32> to vector<8x64xf32>
    %399 = arith.addf %398, %252 : vector<8x64xf32>
    %400 = arith.mulf %395, %399 : vector<8x64xf32>
    %401 = arith.addf %397, %400 : vector<8x64xf32>
    %402 = math.tanh %401 : vector<8x64xf32>
    %403 = arith.subf %383, %402 : vector<8x64xf32>
    %404 = arith.mulf %396, %403 : vector<8x64xf32>
    %405 = arith.addf %402, %404 : vector<8x64xf32>
    %c40_145 = arith.constant 40 : index
    %c0_146 = arith.constant 0 : index
    %406 = vector.load %arg1[%c40_145, %c0_146] : memref<64x64xf32, #tpu.memory_space<vmem>>, vector<8x64xf32>
    %cst_147 = arith.constant 5.000000e-01 : f32
    %407 = vector.broadcast %cst_147 : f32 to vector<8x64xf32>
    %408 = arith.cmpf ogt, %406, %407 : vector<8x64xf32>
    %409 = arith.select %408, %405, %383 : vector<8x64xi1>, vector<8x64xf32>
    %c48_148 = arith.constant 48 : index
    %c0_149 = arith.constant 0 : index
    %410 = vector.load %arg8[%c48_148, %c0_149] : memref<64x192xf32, #tpu.memory_space<vmem>>, vector<8x192xf32>
    %411 = arith.truncf %409 : vector<8x64xf32> to vector<8x64xbf16>
    %cst_150 = arith.constant dense<0.000000e+00> : vector<8x192xf32>
    %412 = tpu.matmul %411, %249, %cst_150 {dimension_numbers = #tpu.dot_dimension_numbers<[1], [0], [0], [1], [0, 0, 1, 1], [], []>} : vector<8x64xbf16>, vector<64x192xbf16>, vector<8x192xf32> -> vector<8x192xf32>
    %413 = vector.extract_strided_slice %410 {offsets = [0, 0], sizes = [8, 128], strides = [1, 1]} : vector<8x192xf32> to vector<8x128xf32>
    %414 = vector.extract_strided_slice %412 {offsets = [0, 0], sizes = [8, 128], strides = [1, 1]} : vector<8x192xf32> to vector<8x128xf32>
    %415 = arith.addf %413, %414 : vector<8x128xf32>
    %416 = arith.negf %415 : vector<8x128xf32>
    %417 = math.exp %416 : vector<8x128xf32>
    %cst_151 = arith.constant 1.000000e+00 : f32
    %418 = vector.broadcast %cst_151 : f32 to vector<8x128xf32>
    %419 = arith.addf %418, %417 : vector<8x128xf32>
    %420 = arith.divf %418, %419 : vector<8x128xf32>
    %421 = vector.extract_strided_slice %420 {offsets = [0, 0], sizes = [8, 64], strides = [1, 1]} : vector<8x128xf32> to vector<8x64xf32>
    %422 = vector.extract_strided_slice %420 {offsets = [0, 64], sizes = [8, 64], strides = [1, 1]} : vector<8x128xf32> to vector<8x64xf32>
    %423 = vector.extract_strided_slice %410 {offsets = [0, 128], sizes = [8, 64], strides = [1, 1]} : vector<8x192xf32> to vector<8x64xf32>
    %424 = vector.extract_strided_slice %412 {offsets = [0, 128], sizes = [8, 64], strides = [1, 1]} : vector<8x192xf32> to vector<8x64xf32>
    %425 = arith.addf %424, %252 : vector<8x64xf32>
    %426 = arith.mulf %421, %425 : vector<8x64xf32>
    %427 = arith.addf %423, %426 : vector<8x64xf32>
    %428 = math.tanh %427 : vector<8x64xf32>
    %429 = arith.subf %409, %428 : vector<8x64xf32>
    %430 = arith.mulf %422, %429 : vector<8x64xf32>
    %431 = arith.addf %428, %430 : vector<8x64xf32>
    %c48_152 = arith.constant 48 : index
    %c0_153 = arith.constant 0 : index
    %432 = vector.load %arg1[%c48_152, %c0_153] : memref<64x64xf32, #tpu.memory_space<vmem>>, vector<8x64xf32>
    %cst_154 = arith.constant 5.000000e-01 : f32
    %433 = vector.broadcast %cst_154 : f32 to vector<8x64xf32>
    %434 = arith.cmpf ogt, %432, %433 : vector<8x64xf32>
    %435 = arith.select %434, %431, %409 : vector<8x64xi1>, vector<8x64xf32>
    %c56_155 = arith.constant 56 : index
    %c0_156 = arith.constant 0 : index
    %436 = vector.load %arg8[%c56_155, %c0_156] : memref<64x192xf32, #tpu.memory_space<vmem>>, vector<8x192xf32>
    %437 = arith.truncf %435 : vector<8x64xf32> to vector<8x64xbf16>
    %cst_157 = arith.constant dense<0.000000e+00> : vector<8x192xf32>
    %438 = tpu.matmul %437, %249, %cst_157 {dimension_numbers = #tpu.dot_dimension_numbers<[1], [0], [0], [1], [0, 0, 1, 1], [], []>} : vector<8x64xbf16>, vector<64x192xbf16>, vector<8x192xf32> -> vector<8x192xf32>
    %439 = vector.extract_strided_slice %436 {offsets = [0, 0], sizes = [8, 128], strides = [1, 1]} : vector<8x192xf32> to vector<8x128xf32>
    %440 = vector.extract_strided_slice %438 {offsets = [0, 0], sizes = [8, 128], strides = [1, 1]} : vector<8x192xf32> to vector<8x128xf32>
    %441 = arith.addf %439, %440 : vector<8x128xf32>
    %442 = arith.negf %441 : vector<8x128xf32>
    %443 = math.exp %442 : vector<8x128xf32>
    %cst_158 = arith.constant 1.000000e+00 : f32
    %444 = vector.broadcast %cst_158 : f32 to vector<8x128xf32>
    %445 = arith.addf %444, %443 : vector<8x128xf32>
    %446 = arith.divf %444, %445 : vector<8x128xf32>
    %447 = vector.extract_strided_slice %446 {offsets = [0, 0], sizes = [8, 64], strides = [1, 1]} : vector<8x128xf32> to vector<8x64xf32>
    %448 = vector.extract_strided_slice %446 {offsets = [0, 64], sizes = [8, 64], strides = [1, 1]} : vector<8x128xf32> to vector<8x64xf32>
    %449 = vector.extract_strided_slice %436 {offsets = [0, 128], sizes = [8, 64], strides = [1, 1]} : vector<8x192xf32> to vector<8x64xf32>
    %450 = vector.extract_strided_slice %438 {offsets = [0, 128], sizes = [8, 64], strides = [1, 1]} : vector<8x192xf32> to vector<8x64xf32>
    %451 = arith.addf %450, %252 : vector<8x64xf32>
    %452 = arith.mulf %447, %451 : vector<8x64xf32>
    %453 = arith.addf %449, %452 : vector<8x64xf32>
    %454 = math.tanh %453 : vector<8x64xf32>
    %455 = arith.subf %435, %454 : vector<8x64xf32>
    %456 = arith.mulf %448, %455 : vector<8x64xf32>
    %457 = arith.addf %454, %456 : vector<8x64xf32>
    %c56_159 = arith.constant 56 : index
    %c0_160 = arith.constant 0 : index
    %458 = vector.load %arg1[%c56_159, %c0_160] : memref<64x64xf32, #tpu.memory_space<vmem>>, vector<8x64xf32>
    %cst_161 = arith.constant 5.000000e-01 : f32
    %459 = vector.broadcast %cst_161 : f32 to vector<8x64xf32>
    %460 = arith.cmpf ogt, %458, %459 : vector<8x64xf32>
    %461 = arith.select %460, %457, %435 : vector<8x64xi1>, vector<8x64xf32>
    %462 = arith.truncf %461 : vector<8x64xf32> to vector<8x64xbf16>
    %c0_162 = arith.constant 0 : index
    %c0_163 = arith.constant 0 : index
    %463 = vector.load %arg4[%c0_162, %c0_163] : memref<64x32xbf16, #tpu.memory_space<vmem>>, vector<64x32xbf16>
    %cst_164 = arith.constant dense<0.000000e+00> : vector<8x32xf32>
    %464 = tpu.matmul %462, %463, %cst_164 {dimension_numbers = #tpu.dot_dimension_numbers<[1], [0], [0], [1], [0, 0, 1, 1], [], []>} : vector<8x64xbf16>, vector<64x32xbf16>, vector<8x32xf32> -> vector<8x32xf32>
    %c0_165 = arith.constant 0 : index
    %c0_166 = arith.constant 0 : index
    %465 = vector.load %arg5[%c0_165, %c0_166] : memref<1x32xf32, #tpu.memory_space<vmem>>, vector<1x32xf32>
    %466 = vector.broadcast %465 : vector<1x32xf32> to vector<8x32xf32>
    %467 = arith.addf %464, %466 : vector<8x32xf32>
    %c0_167 = arith.constant 0 : index
    %c0_168 = arith.constant 0 : index
    %468 = vector.load %arg6[%c0_167, %c0_168] : memref<8x32xf32, #tpu.memory_space<vmem>>, vector<8x32xf32>
    tpu.vector_store %arg6[%c0_167, %c0_168], %467 {strides = array<i32>} : memref<8x32xf32, #tpu.memory_space<vmem>>, vector<8x32xf32>,
    return
  }
}

</mosaic_0001>

<llo_original>
// kernel: relation_encoder_forward.1
$region0: #{relation_encoder_forward.1}
  #allocation0 [shape = 'u32[]', space=smem, size = 0x4, offset = 0x4, fixed_abs, tag = 'smem constant byte address 0x4 - core index']
  #allocation1 [shape = 'u32[72,128]{1,0:T(1,128)}', space=vmem, size = 0x9000, scoped, tag = 'internal scratch']
  #allocation2 [shape = 'f32[64,192]{1,0:T(8,128)}', space=vmem, size = 0x10000, scoped, tag = 'scratch operand']
  #allocation3 [shape = 'f32[64,192]{1,0:T(8,128)}', space=vmem, size = 0x10000, scoped, tag = 'scratch operand']
  #allocation4 [shape = 'f32[64,64]{1,0:T(8,128)}', space=vmem, size = 0x8000, scoped, tag = 'scratch operand']
  #allocation5 [shape = 'f32[64,64]{1,0:T(8,128)}', space=vmem, size = 0x8000, scoped, tag = 'scratch operand']
  %s0 = inlined_call_operand.vmem [shape: bf16[64,32], index: 0, kind: input, shape index: {}]
  %s1 = inlined_call_operand.vmem [shape: f32[64,64], index: 1, kind: input, shape index: {}]
  %s2 = inlined_call_operand.vmem [shape: bf16[288,192], index: 2, kind: input, shape index: {}]
  %s3 = inlined_call_operand.vmem [shape: f32[4,192], index: 3, kind: input, shape index: {}]
  %s4 = inlined_call_operand.vmem [shape: bf16[64,32], index: 4, kind: input, shape index: {}]
  %s5 = inlined_call_operand.vmem [shape: f32[1,32], index: 5, kind: input, shape index: {}]
  %s6 = inlined_call_operand.vmem [shape: f32[8,32], index: 6, kind: output, shape index: {}]
  %s7 = sld [smem:[#allocation0]]
  $region34: #{relation_encoder_forward.1} parent=0
    _
  %s9 = ssub.s32 1, %s7
  %s10 = scalar_select 0, %s9, %s7
  // Predicated region
  $region2: #{relation_encoder_forward.1} parent=0 // pred_check
    _
  $region3: #{relation_encoder_forward.1} parent=0 // pred_check_branch
    %12 = sbr.rel (0) target = $region5
  $region4: #{relation_encoder_forward.1} parent=0 // pred_region
    _
  $region5: #{relation_encoder_forward.1} parent=0 // pred_fallthru
    _
  // Predicated region
  $region6: #{relation_encoder_forward.1} parent=0 // pred_check
    _
  $region7: #{relation_encoder_forward.1} parent=0 // pred_check_branch
    %14 = sbr.rel (0) target = $region9
  $region8: #{relation_encoder_forward.1} parent=0 // pred_region
    _
  $region9: #{relation_encoder_forward.1} parent=0 // pred_fallthru
    _
  // Predicated region
  $region10: #{relation_encoder_forward.1} parent=0 // pred_check
    _
  $region11: #{relation_encoder_forward.1} parent=0 // pred_check_branch
    %16 = sbr.rel (0) target = $region13
  $region12: #{relation_encoder_forward.1} parent=0 // pred_region
    _
  $region13: #{relation_encoder_forward.1} parent=0 // pred_fallthru
    _
  // Predicated region
  $region14: #{relation_encoder_forward.1} parent=0 // pred_check
    _
  $region15: #{relation_encoder_forward.1} parent=0 // pred_check_branch
    %18 = sbr.rel (0) target = $region17
  $region16: #{relation_encoder_forward.1} parent=0 // pred_region
    _
  $region17: #{relation_encoder_forward.1} parent=0 // pred_fallthru
    _
  // Predicated region
  $region18: #{relation_encoder_forward.1} parent=0 // pred_check
    _
  $region19: #{relation_encoder_forward.1} parent=0 // pred_check_branch
    %20 = sbr.rel (0) target = $region21
  $region20: #{relation_encoder_forward.1} parent=0 // pred_region
    _
  $region21: #{relation_encoder_forward.1} parent=0 // pred_fallthru
    _
  // Predicated region
  $region22: #{relation_encoder_forward.1} parent=0 // pred_check
    _
  $region23: #{relation_encoder_forward.1} parent=0 // pred_check_branch
    %22 = sbr.rel (0) target = $region25
  $region24: #{relation_encoder_forward.1} parent=0 // pred_region
    _
  $region25: #{relation_encoder_forward.1} parent=0 // pred_fallthru
    _
  %v24 = vld [vmem:[%s0] sm:$0xf]
  %v25 = vld [vmem:[%s0 + $0x4] sm:$0xf]
  %v26 = vld [vmem:[%s0 + $0x8] sm:$0xf]
  %v27 = vld [vmem:[%s0 + $0xc] sm:$0xf]
  %v28 = vld [vmem:[%s0 + $0x10] sm:$0xf]
  %v29 = vld [vmem:[%s0 + $0x14] sm:$0xf]
  %v30 = vld [vmem:[%s0 + $0x18] sm:$0xf]
  %v31 = vld [vmem:[%s0 + $0x1c] sm:$0xf]
  %v32 = vld [vmem:[%s2] sm:$0xff]
  %v33 = vld [vmem:[%s2 + $0x8] sm:$0xff]
  %v34 = vld [vmem:[%s2 + $0x10] sm:$0xff]
  %v35 = vld [vmem:[%s2 + $0x18] sm:$0xff]
  %v36 = vld [vmem:[%s3] ss:$4 sm:$0x3]
  %v38 = vperm.slane %v36, 0
  %v39 = vperm.slane %v36, 1
  %v50 = vunpack.c.l.b16 %v24
  %v51 = vunpack.c.l.b16 %v25
  %v52 = vunpack.c.l.b16 %v26
  %v53 = vunpack.c.l.b16 %v27
  %v54 = vunpack.c.l.b16 %v28
  %v55 = vunpack.c.l.b16 %v29
  %v56 = vunpack.c.l.b16 %v30
  %v57 = vunpack.c.l.b16 %v31
  %v58 = vpack.c.b16 %v51, %v50
  %v59 = vpack.c.b16 %v53, %v52
  %v60 = vpack.c.b16 %v55, %v54
  %v61 = vpack.c.b16 %v57, %v56
  %v66 = vunpack.c.l.b16 %v32
  %v67 = vunpack.c.h.b16 %v32
  %v68 = vunpack.c.l.b16 %v33
  %v69 = vunpack.c.h.b16 %v33
  %v70 = vunpack.c.l.b16 %v34
  %v71 = vunpack.c.h.b16 %v34
  %v72 = vunpack.c.l.b16 %v35
  %v73 = vunpack.c.h.b16 %v35
  %v74 = vpack.c.b16 %v68, %v66
  %v75 = vpack.c.b16 %v69, %v67
  %v76 = vpack.c.b16 %v72, %v70
  %v77 = vpack.c.b16 %v73, %v71
  %vm82 = vcmask 261120
  %v84 = vsel %vm82, %v58, 0
  %v87 = vsel %vm82, %v59, 0
  %v90 = vsel %vm82, %v60, 0
  %v93 = vsel %vm82, %v61, 0
  %95 = vmatpush.bf16.msra.mxu0 0
  %96 = vmatpush.bf16.msra.mxu0 0
  %97 = vmatpush.bf16.msra.mxu0 0
  %98 = vmatpush.bf16.msra.mxu0 0
  %99 = vmatpush.bf16.msra.mxu0 0
  %100 = vmatpush.bf16.msra.mxu0 0
  %101 = vmatpush.bf16.msra.mxu0 %v76
  %102 = vmatpush.bf16.msra.mxu0 %v74
  %103 = vmatmul.bf16.gmra.mxu0 %v84
  %v104 = vpop.f32.mrf.mxu0
  %v105 = vadd.f32 %v38, %v104
  %v106 = vpop.f32.mrf.mxu0
  %v107 = vadd.f32 %v38, %v106
  %108 = vmatmul.bf16.gmra.mxu0 %v87
  %v109 = vpop.f32.mrf.mxu0
  %v110 = vadd.f32 %v38, %v109
  %v111 = vpop.f32.mrf.mxu0
  %v112 = vadd.f32 %v38, %v111
  %113 = vmatmul.bf16.gmra.mxu0 %v90
  %v114 = vpop.f32.mrf.mxu0
  %v115 = vadd.f32 %v38, %v114
  %v116 = vpop.f32.mrf.mxu0
  %v117 = vadd.f32 %v38, %v116
  %118 = vmatmul.bf16.gmra.mxu0 %v93
  %v119 = vpop.f32.mrf.mxu0
  %v120 = vadd.f32 %v38, %v119
  %v121 = vpop.f32.mrf.mxu0
  %v122 = vadd.f32 %v38, %v121
  %123 = vdwg.mxu0
  %124 = vmatpush.bf16.msra.mxu0 0
  %125 = vmatpush.bf16.msra.mxu0 0
  %126 = vmatpush.bf16.msra.mxu0 0
  %127 = vmatpush.bf16.msra.mxu0 0
  %128 = vmatpush.bf16.msra.mxu0 0
  %129 = vmatpush.bf16.msra.mxu0 0
  %130 = vmatpush.bf16.msra.mxu0 %v77
  %131 = vmatpush.bf16.msra.mxu0 %v75
  %132 = vmatmul.bf16.gmra.mxu0 %v84
  %v133 = vpop.f32.mrf.mxu0
  %v134 = vadd.f32 %v39, %v133
  %v135 = vpop.f32.mrf.mxu0
  %v136 = vadd.f32 %v39, %v135
  %137 = vmatmul.bf16.gmra.mxu0 %v87
  %v138 = vpop.f32.mrf.mxu0
  %v139 = vadd.f32 %v39, %v138
  %v140 = vpop.f32.mrf.mxu0
  %v141 = vadd.f32 %v39, %v140
  %142 = vmatmul.bf16.gmra.mxu0 %v90
  %v143 = vpop.f32.mrf.mxu0
  %v144 = vadd.f32 %v39, %v143
  %v145 = vpop.f32.mrf.mxu0
  %v146 = vadd.f32 %v39, %v145
  %147 = vmatmul.bf16.gmra.mxu0 %v93
  %v148 = vpop.f32.mrf.mxu0
  %v149 = vadd.f32 %v39, %v148
  %v150 = vpop.f32.mrf.mxu0
  %v151 = vadd.f32 %v39, %v150
  %152 = vdwg.mxu0
  %153 = vst [vmem:[#allocation2] sm:$0xff] %v105
  %vm154 = vcmask 523264
  %155 = vst.msk [vmem:[#allocation2 + $0x8] sm:$0xff] %vm154, %v134
  %156 = vst [vmem:[#allocation2 + $0x10] sm:$0xff] %v107
  %157 = vst.msk [vmem:[#allocation2 + $0x18] sm:$0xff] %vm154, %v136
  %158 = vst [vmem:[#allocation2 + $0x20] sm:$0xff] %v110
  %159 = vst.msk [vmem:[#allocation2 + $0x28] sm:$0xff] %vm154, %v139
  %160 = vst [vmem:[#allocation2 + $0x30] sm:$0xff] %v112
  %161 = vst.msk [vmem:[#allocation2 + $0x38] sm:$0xff] %vm154, %v141
  %162 = vst [vmem:[#allocation2 + $0x40] sm:$0xff] %v115
  %163 = vst.msk [vmem:[#allocation2 + $0x48] sm:$0xff] %vm154, %v144
  %164 = vst [vmem:[#allocation2 + $0x50] sm:$0xff] %v117
  %165 = vst.msk [vmem:[#allocation2 + $0x58] sm:$0xff] %vm154, %v146
  %166 = vst [vmem:[#allocation2 + $0x60] sm:$0xff] %v120
  %167 = vst.msk [vmem:[#allocation2 + $0x68] sm:$0xff] %vm154, %v149
  %168 = vst [vmem:[#allocation2 + $0x70] sm:$0xff] %v122
  %169 = vst.msk [vmem:[#allocation2 + $0x78] sm:$0xff] %vm154, %v151
  %v170 = vld [vmem:[%s2 + $0x20] sm:$0xff]
  %v171 = vld [vmem:[%s2 + $0x28] sm:$0xff]
  %v172 = vld [vmem:[%s2 + $0x30] sm:$0xff]
  %v173 = vld [vmem:[%s2 + $0x38] sm:$0xff]
  %v174 = vld [vmem:[%s2 + $0x40] sm:$0xff]
  %v175 = vld [vmem:[%s2 + $0x48] sm:$0xff]
  %v176 = vld [vmem:[%s2 + $0x50] sm:$0xff]
  %v177 = vld [vmem:[%s2 + $0x58] sm:$0xff]
  %v178 = vld [vmem:[%s3 + $0x2] sm:$0x1]
  %v179 = vperm.slane %v178, 0
  %v180 = vld [vmem:[#allocation2] sm:$0xff]
  %v181 = vld [vmem:[#allocation2 + $0x8] sm:$0xff]
  %v190 = vunpack.c.l.b16 %v170
  %v191 = vunpack.c.h.b16 %v170
  %v192 = vunpack.c.l.b16 %v171
  %v193 = vunpack.c.h.b16 %v171
  %v194 = vunpack.c.l.b16 %v172
  %v195 = vunpack.c.h.b16 %v172
  %v196 = vunpack.c.l.b16 %v173
  %v197 = vunpack.c.h.b16 %v173
  %v198 = vunpack.c.l.b16 %v174
  %v199 = vunpack.c.h.b16 %v174
  %v200 = vunpack.c.l.b16 %v175
  %v201 = vunpack.c.h.b16 %v175
  %v202 = vunpack.c.l.b16 %v176
  %v203 = vunpack.c.h.b16 %v176
  %v204 = vunpack.c.l.b16 %v177
  %v205 = vunpack.c.h.b16 %v177
  %v206 = vpack.c.b16 %v192, %v190
  %v207 = vpack.c.b16 %v193, %v191
  %v208 = vpack.c.b16 %v196, %v194
  %v209 = vpack.c.b16 %v197, %v195
  %v210 = vpack.c.b16 %v200, %v198
  %v211 = vpack.c.b16 %v201, %v199
  %v212 = vpack.c.b16 %v204, %v202
  %v213 = vpack.c.b16 %v205, %v203
  %v223 = vsel %vm154, 0, 0
  %225 = vmatpush.bf16.msra.mxu0 0
  %226 = vmatpush.bf16.msra.mxu0 0
  %227 = vmatpush.bf16.msra.mxu0 0
  %228 = vmatpush.bf16.msra.mxu0 0
  %229 = vmatpush.bf16.msra.mxu0 %v212
  %230 = vmatpush.bf16.msra.mxu0 %v210
  %231 = vmatpush.bf16.msra.mxu0 %v208
  %232 = vmatpush.bf16.msra.mxu0 %v206
  %233 = vmatmul.bf16.gmra.mxu0 %v223
  %v234 = vpop.f32.mrf.mxu0
  %v235 = vadd.f32 0.0, %v234
  %v236 = vpop.f32.mrf.mxu0
  %237 = vdwg.mxu0
  %238 = vmatpush.bf16.msra.mxu0 0
  %239 = vmatpush.bf16.msra.mxu0 0
  %240 = vmatpush.bf16.msra.mxu0 0
  %241 = vmatpush.bf16.msra.mxu0 0
  %242 = vmatpush.bf16.msra.mxu0 %v213
  %243 = vmatpush.bf16.msra.mxu0 %v211
  %244 = vmatpush.bf16.msra.mxu0 %v209
  %245 = vmatpush.bf16.msra.mxu0 %v207
  %246 = vmatmul.bf16.gmra.mxu0 %v223
  %v247 = vpop.f32.mrf.mxu0
  %v248 = vadd.f32 0.0, %v247
  %v249 = vpop.f32.mrf.mxu0
  %250 = vdwg.mxu0
  %v251 = vadd.f32 %v180, %v235
  %v252 = vxor.u32 %v251, 2147483648
  %v253 = vmul.f32 %v252, 1.442695
  %v254 = vpow.pop %v253
  %v255 = vadd.f32 %v254, 1.0
  %v256 = vrcp.pop %v255
  %v257 = vmul.f32 %v255, %v256
  %v258 = vsub.f32 1.0, %v257
  %v259 = vmul.f32 %v256, %v258
  %v260 = vadd.f32 %v256, %v259
  %vm261 = vweird.f32 %v255
  %vm262 = vweird.f32 %v256
  %vm263 = vmor %vm261, %vm262
  %v264 = vsel %vm263, %v256, %v260
  %v265 = vand.u32 2147483647, %v255
  %vm266 = vcmp.eq.f32.partialorder %v265, 8.507059e+37
  %v267 = vand.u32 %v255, 2147483648
  %v268 = vor.u32 1.1754944e-38, %v267
  %v269 = vsel %vm266, %v268, %v264
  %v270 = vmul.f32 1.0, %v269
  %v271 = vadd.f32 %v248, %v179
  %v272 = vmul.f32 %v270, %v271
  %v273 = vadd.f32 %v181, %v272
  %v274 = vtanh.pop %v273
  %v275 = vsub.f32 0.0, %v274
  %277 = vrot.lane.b32.xlu0 %v275, 64
  %v278 = vpop.permute.xlu0 %277
  %v280 = vmul.f32 %v270, %v278
  %282 = vrot.lane.b32.xlu0 %v280, 64
  %v283 = vpop.permute.xlu0 %282
  %v285 = vadd.f32 %v274, %v283
  %v286 = vld [vmem:[%s1] sm:$0xff]
  %vm287 = vcmp.gt.f32.partialorder %v286, 0.5
  %v288 = vsel %vm287, %v285, 0.0
  %289 = vst.msk [vmem:[#allocation4] sm:$0xff] %vm154, %v288
  %290 = vst.msk [vmem:[#allocation5 + $0x38] sm:$0xff] %vm154, %v288
  %v291 = vld [vmem:[#allocation2 + $0x10] sm:$0xff]
  %v292 = vld [vmem:[#allocation2 + $0x18] sm:$0xff]
  %v293 = vpack.c.bf16 %v288, %v288
  %v295 = vsel %vm154, %v293, 0
  %297 = vmatpush.bf16.msra.mxu0 0
  %298 = vmatpush.bf16.msra.mxu0 0
  %299 = vmatpush.bf16.msra.mxu0 0
  %300 = vmatpush.bf16.msra.mxu0 0
  %301 = vmatpush.bf16.msra.mxu0 %v212
  %302 = vmatpush.bf16.msra.mxu0 %v210
  %303 = vmatpush.bf16.msra.mxu0 %v208
  %304 = vmatpush.bf16.msra.mxu0 %v206
  %305 = vmatmul.bf16.gmra.mxu0 %v295
  %v306 = vpop.f32.mrf.mxu0
  %v307 = vadd.f32 0.0, %v306
  %v308 = vpop.f32.mrf.mxu0
  %309 = vdwg.mxu0
  %310 = vmatpush.bf16.msra.mxu0 0
  %311 = vmatpush.bf16.msra.mxu0 0
  %312 = vmatpush.bf16.msra.mxu0 0
  %313 = vmatpush.bf16.msra.mxu0 0
  %314 = vmatpush.bf16.msra.mxu0 %v213
  %315 = vmatpush.bf16.msra.mxu0 %v211
  %316 = vmatpush.bf16.msra.mxu0 %v209
  %317 = vmatpush.bf16.msra.mxu0 %v207
  %318 = vmatmul.bf16.gmra.mxu0 %v295
  %v319 = vpop.f32.mrf.mxu0
  %v320 = vadd.f32 0.0, %v319
  %v321 = vpop.f32.mrf.mxu0
  %322 = vdwg.mxu0
  %v323 = vadd.f32 %v291, %v307
  %v324 = vxor.u32 %v323, 2147483648
  %v325 = vmul.f32 %v324, 1.442695
  %v326 = vpow.pop %v325
  %v327 = vadd.f32 %v326, 1.0
  %v328 = vrcp.pop %v327
  %v329 = vmul.f32 %v327, %v328
  %v330 = vsub.f32 1.0, %v329
  %v331 = vmul.f32 %v328, %v330
  %v332 = vadd.f32 %v328, %v331
  %vm333 = vweird.f32 %v327
  %vm334 = vweird.f32 %v328
  %vm335 = vmor %vm333, %vm334
  %v336 = vsel %vm335, %v328, %v332
  %v337 = vand.u32 2147483647, %v327
  %vm338 = vcmp.eq.f32.partialorder %v337, 8.507059e+37
  %v339 = vand.u32 %v327, 2147483648
  %v340 = vor.u32 1.1754944e-38, %v339
  %v341 = vsel %vm338, %v340, %v336
  %v342 = vmul.f32 1.0, %v341
  %v343 = vadd.f32 %v320, %v179
  %v344 = vmul.f32 %v342, %v343
  %v345 = vadd.f32 %v292, %v344
  %v346 = vtanh.pop %v345
  %v347 = vsub.f32 %v288, %v346
  %349 = vrot.lane.b32.xlu0 %v347, 64
  %v350 = vpop.permute.xlu0 %349
  %v352 = vmul.f32 %v342, %v350
  %354 = vrot.lane.b32.xlu0 %v352, 64
  %v355 = vpop.permute.xlu0 %354
  %v357 = vadd.f32 %v346, %v355
  %v358 = vld [vmem:[%s1 + $0x8] sm:$0xff]
  %vm359 = vcmp.gt.f32.partialorder %v358, 0.5
  %v360 = vsel %vm359, %v357, %v288
  %361 = vst.msk [vmem:[#allocation4 + $0x8] sm:$0xff] %vm154, %v360
  %362 = vst.msk [vmem:[#allocation5 + $0x30] sm:$0xff] %vm154, %v360
  %v363 = vld [vmem:[#allocation2 + $0x20] sm:$0xff]
  %v364 = vld [vmem:[#allocation2 + $0x28] sm:$0xff]
  %v365 = vpack.c.bf16 %v360, %v360
  %v367 = vsel %vm154, %v365, 0
  %369 = vmatpush.bf16.msra.mxu0 0
  %370 = vmatpush.bf16.msra.mxu0 0
  %371 = vmatpush.bf16.msra.mxu0 0
  %372 = vmatpush.bf16.msra.mxu0 0
  %373 = vmatpush.bf16.msra.mxu0 %v212
  %374 = vmatpush.bf16.msra.mxu0 %v210
  %375 = vmatpush.bf16.msra.mxu0 %v208
  %376 = vmatpush.bf16.msra.mxu0 %v206
  %377 = vmatmul.bf16.gmra.mxu0 %v367
  %v378 = vpop.f32.mrf.mxu0
  %v379 = vadd.f32 0.0, %v378
  %v380 = vpop.f32.mrf.mxu0
  %381 = vdwg.mxu0
  %382 = vmatpush.bf16.msra.mxu0 0
  %383 = vmatpush.bf16.msra.mxu0 0
  %384 = vmatpush.bf16.msra.mxu0 0
  %385 = vmatpush.bf16.msra.mxu0 0
  %386 = vmatpush.bf16.msra.mxu0 %v213
  %387 = vmatpush.bf16.msra.mxu0 %v211
  %388 = vmatpush.bf16.msra.mxu0 %v209
  %389 = vmatpush.bf16.msra.mxu0 %v207
  %390 = vmatmul.bf16.gmra.mxu0 %v367
  %v391 = vpop.f32.mrf.mxu0
  %v392 = vadd.f32 0.0, %v391
  %v393 = vpop.f32.mrf.mxu0
  %394 = vdwg.mxu0
  %v395 = vadd.f32 %v363, %v379
  %v396 = vxor.u32 %v395, 2147483648
  %v397 = vmul.f32 %v396, 1.442695
  %v398 = vpow.pop %v397
  %v399 = vadd.f32 %v398, 1.0
  %v400 = vrcp.pop %v399
  %v401 = vmul.f32 %v399, %v400
  %v402 = vsub.f32 1.0, %v401
  %v403 = vmul.f32 %v400, %v402
  %v404 = vadd.f32 %v400, %v403
  %vm405 = vweird.f32 %v399
  %vm406 = vweird.f32 %v400
  %vm407 = vmor %vm405, %vm406
  %v408 = vsel %vm407, %v400, %v404
  %v409 = vand.u32 2147483647, %v399
  %vm410 = vcmp.eq.f32.partialorder %v409, 8.507059e+37
  %v411 = vand.u32 %v399, 2147483648
  %v412 = vor.u32 1.1754944e-38, %v411
  %v413 = vsel %vm410, %v412, %v408
  %v414 = vmul.f32 1.0, %v413
  %v415 = vadd.f32 %v392, %v179
  %v416 = vmul.f32 %v414, %v415
  %v417 = vadd.f32 %v364, %v416
  %v418 = vtanh.pop %v417
  %v419 = vsub.f32 %v360, %v418
  %421 = vrot.lane.b32.xlu0 %v419, 64
  %v422 = vpop.permute.xlu0 %421
  %v424 = vmul.f32 %v414, %v422
  %426 = vrot.lane.b32.xlu0 %v424, 64
  %v427 = vpop.permute.xlu0 %426
  %v429 = vadd.f32 %v418, %v427
  %v430 = vld [vmem:[%s1 + $0x10] sm:$0xff]
  %vm431 = vcmp.gt.f32.partialorder %v430, 0.5
  %v432 = vsel %vm431, %v429, %v360
  %433 = vst.msk [vmem:[#allocation4 + $0x10] sm:$0xff] %vm154, %v432
  %434 = vst.msk [vmem:[#allocation5 + $0x28] sm:$0xff] %vm154, %v432
  %v435 = vld [vmem:[#allocation2 + $0x30] sm:$0xff]
  %v436 = vld [vmem:[#allocation2 + $0x38] sm:$0xff]
  %v437 = vpack.c.bf16 %v432, %v432
  %v439 = vsel %vm154, %v437, 0
  %441 = vmatpush.bf16.msra.mxu0 0
  %442 = vmatpush.bf16.msra.mxu0 0
  %443 = vmatpush.bf16.msra.mxu0 0
  %444 = vmatpush.bf16.msra.mxu0 0
  %445 = vmatpush.bf16.msra.mxu0 %v212
  %446 = vmatpush.bf16.msra.mxu0 %v210
  %447 = vmatpush.bf16.msra.mxu0 %v208
  %448 = vmatpush.bf16.msra.mxu0 %v206
  %449 = vmatmul.bf16.gmra.mxu0 %v439
  %v450 = vpop.f32.mrf.mxu0
  %v451 = vadd.f32 0.0, %v450
  %v452 = vpop.f32.mrf.mxu0
  %453 = vdwg.mxu0
  %454 = vmatpush.bf16.msra.mxu0 0
  %455 = vmatpush.bf16.msra.mxu0 0
  %456 = vmatpush.bf16.msra.mxu0 0
  %457 = vmatpush.bf16.msra.mxu0 0
  %458 = vmatpush.bf16.msra.mxu0 %v213
  %459 = vmatpush.bf16.msra.mxu0 %v211
  %460 = vmatpush.bf16.msra.mxu0 %v209
  %461 = vmatpush.bf16.msra.mxu0 %v207
  %462 = vmatmul.bf16.gmra.mxu0 %v439
  %v463 = vpop.f32.mrf.mxu0
  %v464 = vadd.f32 0.0, %v463
  %v465 = vpop.f32.mrf.mxu0
  %466 = vdwg.mxu0
  %v467 = vadd.f32 %v435, %v451
  %v468 = vxor.u32 %v467, 2147483648
  %v469 = vmul.f32 %v468, 1.442695
  %v470 = vpow.pop %v469
  %v471 = vadd.f32 %v470, 1.0
  %v472 = vrcp.pop %v471
  %v473 = vmul.f32 %v471, %v472
  %v474 = vsub.f32 1.0, %v473
  %v475 = vmul.f32 %v472, %v474
  %v476 = vadd.f32 %v472, %v475
  %vm477 = vweird.f32 %v471
  %vm478 = vweird.f32 %v472
  %vm479 = vmor %vm477, %vm478
  %v480 = vsel %vm479, %v472, %v476
  %v481 = vand.u32 2147483647, %v471
  %vm482 = vcmp.eq.f32.partialorder %v481, 8.507059e+37
  %v483 = vand.u32 %v471, 2147483648
  %v484 = vor.u32 1.1754944e-38, %v483
  %v485 = vsel %vm482, %v484, %v480
  %v486 = vmul.f32 1.0, %v485
  %v487 = vadd.f32 %v464, %v179
  %v488 = vmul.f32 %v486, %v487
  %v489 = vadd.f32 %v436, %v488
  %v490 = vtanh.pop %v489
  %v491 = vsub.f32 %v432, %v490
  %493 = vrot.lane.b32.xlu0 %v491, 64
  %v494 = vpop.permute.xlu0 %493
  %v496 = vmul.f32 %v486, %v494
  %498 = vrot.lane.b32.xlu0 %v496, 64
  %v499 = vpop.permute.xlu0 %498
  %v501 = vadd.f32 %v490, %v499
  %v502 = vld [vmem:[%s1 + $0x18] sm:$0xff]
  %vm503 = vcmp.gt.f32.partialorder %v502, 0.5
  %v504 = vsel %vm503, %v501, %v432
  %505 = vst.msk [vmem:[#allocation4 + $0x18] sm:$0xff] %vm154, %v504
  %506 = vst.msk [vmem:[#allocation5 + $0x20] sm:$0xff] %vm154, %v504
  %v507 = vld [vmem:[#allocation2 + $0x40] sm:$0xff]
  %v508 = vld [vmem:[#allocation2 + $0x48] sm:$0xff]
  %v509 = vpack.c.bf16 %v504, %v504
  %v511 = vsel %vm154, %v509, 0
  %513 = vmatpush.bf16.msra.mxu0 0
  %514 = vmatpush.bf16.msra.mxu0 0
  %515 = vmatpush.bf16.msra.mxu0 0
  %516 = vmatpush.bf16.msra.mxu0 0
  %517 = vmatpush.bf16.msra.mxu0 %v212
  %518 = vmatpush.bf16.msra.mxu0 %v210
  %519 = vmatpush.bf16.msra.mxu0 %v208
  %520 = vmatpush.bf16.msra.mxu0 %v206
  %521 = vmatmul.bf16.gmra.mxu0 %v511
  %v522 = vpop.f32.mrf.mxu0
  %v523 = vadd.f32 0.0, %v522
  %v524 = vpop.f32.mrf.mxu0
  %525 = vdwg.mxu0
  %526 = vmatpush.bf16.msra.mxu0 0
  %527 = vmatpush.bf16.msra.mxu0 0
  %528 = vmatpush.bf16.msra.mxu0 0
  %529 = vmatpush.bf16.msra.mxu0 0
  %530 = vmatpush.bf16.msra.mxu0 %v213
  %531 = vmatpush.bf16.msra.mxu0 %v211
  %532 = vmatpush.bf16.msra.mxu0 %v209
  %533 = vmatpush.bf16.msra.mxu0 %v207
  %534 = vmatmul.bf16.gmra.mxu0 %v511
  %v535 = vpop.f32.mrf.mxu0
  %v536 = vadd.f32 0.0, %v535
  %v537 = vpop.f32.mrf.mxu0
  %538 = vdwg.mxu0
  %v539 = vadd.f32 %v507, %v523
  %v540 = vxor.u32 %v539, 2147483648
  %v541 = vmul.f32 %v540, 1.442695
  %v542 = vpow.pop %v541
  %v543 = vadd.f32 %v542, 1.0
  %v544 = vrcp.pop %v543
  %v545 = vmul.f32 %v543, %v544
  %v546 = vsub.f32 1.0, %v545
  %v547 = vmul.f32 %v544, %v546
  %v548 = vadd.f32 %v544, %v547
  %vm549 = vweird.f32 %v543
  %vm550 = vweird.f32 %v544
  %vm551 = vmor %vm549, %vm550
  %v552 = vsel %vm551, %v544, %v548
  %v553 = vand.u32 2147483647, %v543
  %vm554 = vcmp.eq.f32.partialorder %v553, 8.507059e+37
  %v555 = vand.u32 %v543, 2147483648
  %v556 = vor.u32 1.1754944e-38, %v555
  %v557 = vsel %vm554, %v556, %v552
  %v558 = vmul.f32 1.0, %v557
  %v559 = vadd.f32 %v536, %v179
  %v560 = vmul.f32 %v558, %v559
  %v561 = vadd.f32 %v508, %v560
  %v562 = vtanh.pop %v561
  %v563 = vsub.f32 %v504, %v562
  %565 = vrot.lane.b32.xlu0 %v563, 64
  %v566 = vpop.permute.xlu0 %565
  %v568 = vmul.f32 %v558, %v566
  %570 = vrot.lane.b32.xlu0 %v568, 64
  %v571 = vpop.permute.xlu0 %570
  %v573 = vadd.f32 %v562, %v571
  %v574 = vld [vmem:[%s1 + $0x20] sm:$0xff]
  %vm575 = vcmp.gt.f32.partialorder %v574, 0.5
  %v576 = vsel %vm575, %v573, %v504
  %577 = vst.msk [vmem:[#allocation4 + $0x20] sm:$0xff] %vm154, %v576
  %578 = vst.msk [vmem:[#allocation5 + $0x18] sm:$0xff] %vm154, %v576
  %v579 = vld [vmem:[#allocation2 + $0x50] sm:$0xff]
  %v580 = vld [vmem:[#allocation2 + $0x58] sm:$0xff]
  %v581 = vpack.c.bf16 %v576, %v576
  %v583 = vsel %vm154, %v581, 0
  %585 = vmatpush.bf16.msra.mxu0 0
  %586 = vmatpush.bf16.msra.mxu0 0
  %587 = vmatpush.bf16.msra.mxu0 0
  %588 = vmatpush.bf16.msra.mxu0 0
  %589 = vmatpush.bf16.msra.mxu0 %v212
  %590 = vmatpush.bf16.msra.mxu0 %v210
  %591 = vmatpush.bf16.msra.mxu0 %v208
  %592 = vmatpush.bf16.msra.mxu0 %v206
  %593 = vmatmul.bf16.gmra.mxu0 %v583
  %v594 = vpop.f32.mrf.mxu0
  %v595 = vadd.f32 0.0, %v594
  %v596 = vpop.f32.mrf.mxu0
  %597 = vdwg.mxu0
  %598 = vmatpush.bf16.msra.mxu0 0
  %599 = vmatpush.bf16.msra.mxu0 0
  %600 = vmatpush.bf16.msra.mxu0 0
  %601 = vmatpush.bf16.msra.mxu0 0
  %602 = vmatpush.bf16.msra.mxu0 %v213
  %603 = vmatpush.bf16.msra.mxu0 %v211
  %604 = vmatpush.bf16.msra.mxu0 %v209
  %605 = vmatpush.bf16.msra.mxu0 %v207
  %606 = vmatmul.bf16.gmra.mxu0 %v583
  %v607 = vpop.f32.mrf.mxu0
  %v608 = vadd.f32 0.0, %v607
  %v609 = vpop.f32.mrf.mxu0
  %610 = vdwg.mxu0
  %v611 = vadd.f32 %v579, %v595
  %v612 = vxor.u32 %v611, 2147483648
  %v613 = vmul.f32 %v612, 1.442695
  %v614 = vpow.pop %v613
  %v615 = vadd.f32 %v614, 1.0
  %v616 = vrcp.pop %v615
  %v617 = vmul.f32 %v615, %v616
  %v618 = vsub.f32 1.0, %v617
  %v619 = vmul.f32 %v616, %v618
  %v620 = vadd.f32 %v616, %v619
  %vm621 = vweird.f32 %v615
  %vm622 = vweird.f32 %v616
  %vm623 = vmor %vm621, %vm622
  %v624 = vsel %vm623, %v616, %v620
  %v625 = vand.u32 2147483647, %v615
  %vm626 = vcmp.eq.f32.partialorder %v625, 8.507059e+37
  %v627 = vand.u32 %v615, 2147483648
  %v628 = vor.u32 1.1754944e-38, %v627
  %v629 = vsel %vm626, %v628, %v624
  %v630 = vmul.f32 1.0, %v629
  %v631 = vadd.f32 %v608, %v179
  %v632 = vmul.f32 %v630, %v631
  %v633 = vadd.f32 %v580, %v632
  %v634 = vtanh.pop %v633
  %v635 = vsub.f32 %v576, %v634
  %637 = vrot.lane.b32.xlu0 %v635, 64
  %v638 = vpop.permute.xlu0 %637
  %v640 = vmul.f32 %v630, %v638
  %642 = vrot.lane.b32.xlu0 %v640, 64
  %v643 = vpop.permute.xlu0 %642
  %v645 = vadd.f32 %v634, %v643
  %v646 = vld [vmem:[%s1 + $0x28] sm:$0xff]
  %vm647 = vcmp.gt.f32.partialorder %v646, 0.5
  %v648 = vsel %vm647, %v645, %v576
  %649 = vst.msk [vmem:[#allocation4 + $0x28] sm:$0xff] %vm154, %v648
  %650 = vst.msk [vmem:[#allocation5 + $0x10] sm:$0xff] %vm154, %v648
  %v651 = vld [vmem:[#allocation2 + $0x60] sm:$0xff]
  %v652 = vld [vmem:[#allocation2 + $0x68] sm:$0xff]
  %v653 = vpack.c.bf16 %v648, %v648
  %v655 = vsel %vm154, %v653, 0
  %657 = vmatpush.bf16.msra.mxu0 0
  %658 = vmatpush.bf16.msra.mxu0 0
  %659 = vmatpush.bf16.msra.mxu0 0
  %660 = vmatpush.bf16.msra.mxu0 0
  %661 = vmatpush.bf16.msra.mxu0 %v212
  %662 = vmatpush.bf16.msra.mxu0 %v210
  %663 = vmatpush.bf16.msra.mxu0 %v208
  %664 = vmatpush.bf16.msra.mxu0 %v206
  %665 = vmatmul.bf16.gmra.mxu0 %v655
  %v666 = vpop.f32.mrf.mxu0
  %v667 = vadd.f32 0.0, %v666
  %v668 = vpop.f32.mrf.mxu0
  %669 = vdwg.mxu0
  %670 = vmatpush.bf16.msra.mxu0 0
  %671 = vmatpush.bf16.msra.mxu0 0
  %672 = vmatpush.bf16.msra.mxu0 0
  %673 = vmatpush.bf16.msra.mxu0 0
  %674 = vmatpush.bf16.msra.mxu0 %v213
  %675 = vmatpush.bf16.msra.mxu0 %v211
  %676 = vmatpush.bf16.msra.mxu0 %v209
  %677 = vmatpush.bf16.msra.mxu0 %v207
  %678 = vmatmul.bf16.gmra.mxu0 %v655
  %v679 = vpop.f32.mrf.mxu0
  %v680 = vadd.f32 0.0, %v679
  %v681 = vpop.f32.mrf.mxu0
  %682 = vdwg.mxu0
  %v683 = vadd.f32 %v651, %v667
  %v684 = vxor.u32 %v683, 2147483648
  %v685 = vmul.f32 %v684, 1.442695
  %v686 = vpow.pop %v685
  %v687 = vadd.f32 %v686, 1.0
  %v688 = vrcp.pop %v687
  %v689 = vmul.f32 %v687, %v688
  %v690 = vsub.f32 1.0, %v689
  %v691 = vmul.f32 %v688, %v690
  %v692 = vadd.f32 %v688, %v691
  %vm693 = vweird.f32 %v687
  %vm694 = vweird.f32 %v688
  %vm695 = vmor %vm693, %vm694
  %v696 = vsel %vm695, %v688, %v692
  %v697 = vand.u32 2147483647, %v687
  %vm698 = vcmp.eq.f32.partialorder %v697, 8.507059e+37
  %v699 = vand.u32 %v687, 2147483648
  %v700 = vor.u32 1.1754944e-38, %v699
  %v701 = vsel %vm698, %v700, %v696
  %v702 = vmul.f32 1.0, %v701
  %v703 = vadd.f32 %v680, %v179
  %v704 = vmul.f32 %v702, %v703
  %v705 = vadd.f32 %v652, %v704
  %v706 = vtanh.pop %v705
  %v707 = vsub.f32 %v648, %v706
  %709 = vrot.lane.b32.xlu0 %v707, 64
  %v710 = vpop.permute.xlu0 %709
  %v712 = vmul.f32 %v702, %v710
  %714 = vrot.lane.b32.xlu0 %v712, 64
  %v715 = vpop.permute.xlu0 %714
  %v717 = vadd.f32 %v706, %v715
  %v718 = vld [vmem:[%s1 + $0x30] sm:$0xff]
  %vm719 = vcmp.gt.f32.partialorder %v718, 0.5
  %v720 = vsel %vm719, %v717, %v648
  %721 = vst.msk [vmem:[#allocation4 + $0x30] sm:$0xff] %vm154, %v720
  %722 = vst.msk [vmem:[#allocation5 + $0x8] sm:$0xff] %vm154, %v720
  %v723 = vld [vmem:[#allocation2 + $0x70] sm:$0xff]
  %v724 = vld [vmem:[#allocation2 + $0x78] sm:$0xff]
  %v725 = vpack.c.bf16 %v720, %v720
  %v727 = vsel %vm154, %v725, 0
  %729 = vmatpush.bf16.msra.mxu0 0
  %730 = vmatpush.bf16.msra.mxu0 0
  %731 = vmatpush.bf16.msra.mxu0 0
  %732 = vmatpush.bf16.msra.mxu0 0
  %733 = vmatpush.bf16.msra.mxu0 %v212
  %734 = vmatpush.bf16.msra.mxu0 %v210
  %735 = vmatpush.bf16.msra.mxu0 %v208
  %736 = vmatpush.bf16.msra.mxu0 %v206
  %737 = vmatmul.bf16.gmra.mxu0 %v727
  %v738 = vpop.f32.mrf.mxu0
  %v739 = vadd.f32 0.0, %v738
  %v740 = vpop.f32.mrf.mxu0
  %741 = vdwg.mxu0
  %742 = vmatpush.bf16.msra.mxu0 0
  %743 = vmatpush.bf16.msra.mxu0 0
  %744 = vmatpush.bf16.msra.mxu0 0
  %745 = vmatpush.bf16.msra.mxu0 0
  %746 = vmatpush.bf16.msra.mxu0 %v213
  %747 = vmatpush.bf16.msra.mxu0 %v211
  %748 = vmatpush.bf16.msra.mxu0 %v209
  %749 = vmatpush.bf16.msra.mxu0 %v207
  %750 = vmatmul.bf16.gmra.mxu0 %v727
  %v751 = vpop.f32.mrf.mxu0
  %v752 = vadd.f32 0.0, %v751
  %v753 = vpop.f32.mrf.mxu0
  %754 = vdwg.mxu0
  %v755 = vadd.f32 %v723, %v739
  %v756 = vxor.u32 %v755, 2147483648
  %v757 = vmul.f32 %v756, 1.442695
  %v758 = vpow.pop %v757
  %v759 = vadd.f32 %v758, 1.0
  %v760 = vrcp.pop %v759
  %v761 = vmul.f32 %v759, %v760
  %v762 = vsub.f32 1.0, %v761
  %v763 = vmul.f32 %v760, %v762
  %v764 = vadd.f32 %v760, %v763
  %vm765 = vweird.f32 %v759
  %vm766 = vweird.f32 %v760
  %vm767 = vmor %vm765, %vm766
  %v768 = vsel %vm767, %v760, %v764
  %v769 = vand.u32 2147483647, %v759
  %vm770 = vcmp.eq.f32.partialorder %v769, 8.507059e+37
  %v771 = vand.u32 %v759, 2147483648
  %v772 = vor.u32 1.1754944e-38, %v771
  %v773 = vsel %vm770, %v772, %v768
  %v774 = vmul.f32 1.0, %v773
  %v775 = vadd.f32 %v752, %v179
  %v776 = vmul.f32 %v774, %v775
  %v777 = vadd.f32 %v724, %v776
  %v778 = vtanh.pop %v777
  %v779 = vsub.f32 %v720, %v778
  %781 = vrot.lane.b32.xlu0 %v779, 64
  %v782 = vpop.permute.xlu0 %781
  %v784 = vmul.f32 %v774, %v782
  %786 = vrot.lane.b32.xlu0 %v784, 64
  %v787 = vpop.permute.xlu0 %786
  %v789 = vadd.f32 %v778, %v787
  %v790 = vld [vmem:[%s1 + $0x38] sm:$0xff]
  %vm791 = vcmp.gt.f32.partialorder %v790, 0.5
  %v792 = vsel %vm791, %v789, %v720
  %793 = vst.msk [vmem:[#allocation4 + $0x38] sm:$0xff] %vm154, %v792
  %794 = vst.msk [vmem:[#allocation5] sm:$0xff] %vm154, %v792
  %v795 = vld [vmem:[#allocation4] sm:$0xff]
  %v796 = vld [vmem:[#allocation4 + $0x8] sm:$0xff]
  %v797 = vld [vmem:[#allocation4 + $0x10] sm:$0xff]
  %v798 = vld [vmem:[#allocation4 + $0x18] sm:$0xff]
  %v799 = vld [vmem:[#allocation4 + $0x20] sm:$0xff]
  %v800 = vld [vmem:[#allocation4 + $0x28] sm:$0xff]
  %v801 = vld [vmem:[#allocation4 + $0x30] sm:$0xff]
  %v802 = vld [vmem:[#allocation4 + $0x38] sm:$0xff]
  %v803 = vpack.c.bf16 %v796, %v795
  %v804 = vpack.c.bf16 %v798, %v797
  %v805 = vpack.c.bf16 %v800, %v799
  %v806 = vpack.c.bf16 %v802, %v801
  %v807 = vld [vmem:[%s2 + $0x60] sm:$0xff]
  %v808 = vld [vmem:[%s2 + $0x68] sm:$0xff]
  %v809 = vld [vmem:[%s2 + $0x70] sm:$0xff]
  %v810 = vld [vmem:[%s2 + $0x78] sm:$0xff]
  %v811 = vld [vmem:[%s2 + $0x80] sm:$0xff]
  %v812 = vld [vmem:[%s2 + $0x88] sm:$0xff]
  %v813 = vld [vmem:[%s2 + $0x90] sm:$0xff]
  %v814 = vld [vmem:[%s2 + $0x98] sm:$0xff]
  %v815 = vld [vmem:[#allocation5] sm:$0xff]
  %v816 = vld [vmem:[#allocation5 + $0x8] sm:$0xff]
  %v817 = vld [vmem:[#allocation5 + $0x10] sm:$0xff]
  %v818 = vld [vmem:[#allocation5 + $0x18] sm:$0xff]
  %v819 = vld [vmem:[#allocation5 + $0x20] sm:$0xff]
  %v820 = vld [vmem:[#allocation5 + $0x28] sm:$0xff]
  %v821 = vld [vmem:[#allocation5 + $0x30] sm:$0xff]
  %v822 = vld [vmem:[#allocation5 + $0x38] sm:$0xff]
  %v823 = vpack.c.bf16 %v816, %v815
  %v824 = vpack.c.bf16 %v818, %v817
  %v825 = vpack.c.bf16 %v820, %v819
  %v826 = vpack.c.bf16 %v822, %v821
  %v827 = vld [vmem:[%s2 + $0xa0] sm:$0xff]
  %v828 = vld [vmem:[%s2 + $0xa8] sm:$0xff]
  %v829 = vld [vmem:[%s2 + $0xb0] sm:$0xff]
  %v830 = vld [vmem:[%s2 + $0xb8] sm:$0xff]
  %v831 = vld [vmem:[%s2 + $0xc0] sm:$0xff]
  %v832 = vld [vmem:[%s2 + $0xc8] sm:$0xff]
  %v833 = vld [vmem:[%s2 + $0xd0] sm:$0xff]
  %v834 = vld [vmem:[%s2 + $0xd8] sm:$0xff]
  %v843 = vunpack.c.l.b16 %v827
  %v844 = vunpack.c.h.b16 %v827
  %v845 = vunpack.c.l.b16 %v828
  %v846 = vunpack.c.h.b16 %v828
  %v847 = vunpack.c.l.b16 %v829
  %v848 = vunpack.c.h.b16 %v829
  %v849 = vunpack.c.l.b16 %v830
  %v850 = vunpack.c.h.b16 %v830
  %v851 = vunpack.c.l.b16 %v831
  %v852 = vunpack.c.h.b16 %v831
  %v853 = vunpack.c.l.b16 %v832
  %v854 = vunpack.c.h.b16 %v832
  %v855 = vunpack.c.l.b16 %v833
  %v856 = vunpack.c.h.b16 %v833
  %v857 = vunpack.c.l.b16 %v834
  %v858 = vunpack.c.h.b16 %v834
  %v859 = vpack.c.b16 %v845, %v843
  %v860 = vpack.c.b16 %v846, %v844
  %v861 = vpack.c.b16 %v849, %v847
  %v862 = vpack.c.b16 %v850, %v848
  %v863 = vpack.c.b16 %v853, %v851
  %v864 = vpack.c.b16 %v854, %v852
  %v865 = vpack.c.b16 %v857, %v855
  %v866 = vpack.c.b16 %v858, %v856
  %v876 = vsel %vm154, %v823, 0
  %v879 = vsel %vm154, %v824, 0
  %v882 = vsel %vm154, %v825, 0
  %v885 = vsel %vm154, %v826, 0
  %887 = vmatpush.bf16.msra.mxu0 0
  %888 = vmatpush.bf16.msra.mxu0 0
  %889 = vmatpush.bf16.msra.mxu0 0
  %890 = vmatpush.bf16.msra.mxu0 0
  %891 = vmatpush.bf16.msra.mxu0 %v865
  %892 = vmatpush.bf16.msra.mxu0 %v863
  %893 = vmatpush.bf16.msra.mxu0 %v861
  %894 = vmatpush.bf16.msra.mxu0 %v859
  %895 = vmatmul.bf16.gmra.mxu0 %v876
  %v896 = vpop.f32.mrf.mxu0
  %v897 = vadd.f32 0.0, %v896
  %v898 = vpop.f32.mrf.mxu0
  %v899 = vadd.f32 0.0, %v898
  %900 = vmatmul.bf16.gmra.mxu0 %v879
  %v901 = vpop.f32.mrf.mxu0
  %v902 = vadd.f32 0.0, %v901
  %v903 = vpop.f32.mrf.mxu0
  %v904 = vadd.f32 0.0, %v903
  %905 = vmatmul.bf16.gmra.mxu0 %v882
  %v906 = vpop.f32.mrf.mxu0
  %v907 = vadd.f32 0.0, %v906
  %v908 = vpop.f32.mrf.mxu0
  %v909 = vadd.f32 0.0, %v908
  %910 = vmatmul.bf16.gmra.mxu0 %v885
  %v911 = vpop.f32.mrf.mxu0
  %v912 = vadd.f32 0.0, %v911
  %v913 = vpop.f32.mrf.mxu0
  %v914 = vadd.f32 0.0, %v913
  %915 = vdwg.mxu0
  %916 = vmatpush.bf16.msra.mxu0 0
  %917 = vmatpush.bf16.msra.mxu0 0
  %918 = vmatpush.bf16.msra.mxu0 0
  %919 = vmatpush.bf16.msra.mxu0 0
  %920 = vmatpush.bf16.msra.mxu0 %v866
  %921 = vmatpush.bf16.msra.mxu0 %v864
  %922 = vmatpush.bf16.msra.mxu0 %v862
  %923 = vmatpush.bf16.msra.mxu0 %v860
  %924 = vmatmul.bf16.gmra.mxu0 %v876
  %v925 = vpop.f32.mrf.mxu0
  %v926 = vadd.f32 0.0, %v925
  %v927 = vpop.f32.mrf.mxu0
  %v928 = vadd.f32 0.0, %v927
  %929 = vmatmul.bf16.gmra.mxu0 %v879
  %v930 = vpop.f32.mrf.mxu0
  %v931 = vadd.f32 0.0, %v930
  %v932 = vpop.f32.mrf.mxu0
  %v933 = vadd.f32 0.0, %v932
  %934 = vmatmul.bf16.gmra.mxu0 %v882
  %v935 = vpop.f32.mrf.mxu0
  %v936 = vadd.f32 0.0, %v935
  %v937 = vpop.f32.mrf.mxu0
  %v938 = vadd.f32 0.0, %v937
  %939 = vmatmul.bf16.gmra.mxu0 %v885
  %v940 = vpop.f32.mrf.mxu0
  %v941 = vadd.f32 0.0, %v940
  %v942 = vpop.f32.mrf.mxu0
  %v943 = vadd.f32 0.0, %v942
  %944 = vdwg.mxu0
  %v953 = vunpack.c.l.b16 %v807
  %v954 = vunpack.c.h.b16 %v807
  %v955 = vunpack.c.l.b16 %v808
  %v956 = vunpack.c.h.b16 %v808
  %v957 = vunpack.c.l.b16 %v809
  %v958 = vunpack.c.h.b16 %v809
  %v959 = vunpack.c.l.b16 %v810
  %v960 = vunpack.c.h.b16 %v810
  %v961 = vunpack.c.l.b16 %v811
  %v962 = vunpack.c.h.b16 %v811
  %v963 = vunpack.c.l.b16 %v812
  %v964 = vunpack.c.h.b16 %v812
  %v965 = vunpack.c.l.b16 %v813
  %v966 = vunpack.c.h.b16 %v813
  %v967 = vunpack.c.l.b16 %v814
  %v968 = vunpack.c.h.b16 %v814
  %v969 = vpack.c.b16 %v955, %v953
  %v970 = vpack.c.b16 %v956, %v954
  %v971 = vpack.c.b16 %v959, %v957
  %v972 = vpack.c.b16 %v960, %v958
  %v973 = vpack.c.b16 %v963, %v961
  %v974 = vpack.c.b16 %v964, %v962
  %v975 = vpack.c.b16 %v967, %v965
  %v976 = vpack.c.b16 %v968, %v966
  %v986 = vsel %vm154, %v803, 0
  %v989 = vsel %vm154, %v804, 0
  %v992 = vsel %vm154, %v805, 0
  %v995 = vsel %vm154, %v806, 0
  %997 = vmatpush.bf16.msra.mxu0 0
  %998 = vmatpush.bf16.msra.mxu0 0
  %999 = vmatpush.bf16.msra.mxu0 0
  %1000 = vmatpush.bf16.msra.mxu0 0
  %1001 = vmatpush.bf16.msra.mxu0 %v975
  %1002 = vmatpush.bf16.msra.mxu0 %v973
  %1003 = vmatpush.bf16.msra.mxu0 %v971
  %1004 = vmatpush.bf16.msra.mxu0 %v969
  %1005 = vmatmul.bf16.gmra.mxu0 %v986
  %v1006 = vpop.f32.mrf.mxu0
  %v1007 = vadd.f32 %v897, %v1006
  %v1008 = vpop.f32.mrf.mxu0
  %v1009 = vadd.f32 %v899, %v1008
  %1010 = vmatmul.bf16.gmra.mxu0 %v989
  %v1011 = vpop.f32.mrf.mxu0
  %v1012 = vadd.f32 %v902, %v1011
  %v1013 = vpop.f32.mrf.mxu0
  %v1014 = vadd.f32 %v904, %v1013
  %1015 = vmatmul.bf16.gmra.mxu0 %v992
  %v1016 = vpop.f32.mrf.mxu0
  %v1017 = vadd.f32 %v907, %v1016
  %v1018 = vpop.f32.mrf.mxu0
  %v1019 = vadd.f32 %v909, %v1018
  %1020 = vmatmul.bf16.gmra.mxu0 %v995
  %v1021 = vpop.f32.mrf.mxu0
  %v1022 = vadd.f32 %v912, %v1021
  %v1023 = vpop.f32.mrf.mxu0
  %v1024 = vadd.f32 %v914, %v1023
  %1025 = vdwg.mxu0
  %1026 = vmatpush.bf16.msra.mxu0 0
  %1027 = vmatpush.bf16.msra.mxu0 0
  %1028 = vmatpush.bf16.msra.mxu0 0
  %1029 = vmatpush.bf16.msra.mxu0 0
  %1030 = vmatpush.bf16.msra.mxu0 %v976
  %1031 = vmatpush.bf16.msra.mxu0 %v974
  %1032 = vmatpush.bf16.msra.mxu0 %v972
  %1033 = vmatpush.bf16.msra.mxu0 %v970
  %1034 = vmatmul.bf16.gmra.mxu0 %v986
  %v1035 = vpop.f32.mrf.mxu0
  %v1036 = vadd.f32 %v926, %v1035
  %v1037 = vpop.f32.mrf.mxu0
  %v1038 = vadd.f32 %v928, %v1037
  %1039 = vmatmul.bf16.gmra.mxu0 %v989
  %v1040 = vpop.f32.mrf.mxu0
  %v1041 = vadd.f32 %v931, %v1040
  %v1042 = vpop.f32.mrf.mxu0
  %v1043 = vadd.f32 %v933, %v1042
  %1044 = vmatmul.bf16.gmra.mxu0 %v992
  %v1045 = vpop.f32.mrf.mxu0
  %v1046 = vadd.f32 %v936, %v1045
  %v1047 = vpop.f32.mrf.mxu0
  %v1048 = vadd.f32 %v938, %v1047
  %1049 = vmatmul.bf16.gmra.mxu0 %v995
  %v1050 = vpop.f32.mrf.mxu0
  %v1051 = vadd.f32 %v941, %v1050
  %v1052 = vpop.f32.mrf.mxu0
  %v1053 = vadd.f32 %v943, %v1052
  %1054 = vdwg.mxu0
  %s1055 = scalar_lea.vmem %s3, 1
  %v1056 = vld [vmem:[%s1055] ss:$4 sm:$0x3]
  %v1058 = vperm.slane %v1056, 0
  %v1059 = vperm.slane %v1056, 1
  %v1062 = vadd.f32 %v1007, %v1058
  %v1063 = vadd.f32 %v1036, %v1059
  %v1064 = vadd.f32 %v1009, %v1058
  %v1065 = vadd.f32 %v1038, %v1059
  %v1066 = vadd.f32 %v1012, %v1058
  %v1067 = vadd.f32 %v1041, %v1059
  %v1068 = vadd.f32 %v1014, %v1058
  %v1069 = vadd.f32 %v1043, %v1059
  %v1070 = vadd.f32 %v1017, %v1058
  %v1071 = vadd.f32 %v1046, %v1059
  %v1072 = vadd.f32 %v1019, %v1058
  %v1073 = vadd.f32 %v1048, %v1059
  %v1074 = vadd.f32 %v1022, %v1058
  %v1075 = vadd.f32 %v1051, %v1059
  %v1076 = vadd.f32 %v1024, %v1058
  %v1077 = vadd.f32 %v1053, %v1059
  %1078 = vst [vmem:[#allocation3] sm:$0xff] %v1062
  %1079 = vst.msk [vmem:[#allocation3 + $0x8] sm:$0xff] %vm154, %v1063
  %1080 = vst [vmem:[#allocation3 + $0x10] sm:$0xff] %v1064
  %1081 = vst.msk [vmem:[#allocation3 + $0x18] sm:$0xff] %vm154, %v1065
  %1082 = vst [vmem:[#allocation3 + $0x20] sm:$0xff] %v1066
  %1083 = vst.msk [vmem:[#allocation3 + $0x28] sm:$0xff] %vm154, %v1067
  %1084 = vst [vmem:[#allocation3 + $0x30] sm:$0xff] %v1068
  %1085 = vst.msk [vmem:[#allocation3 + $0x38] sm:$0xff] %vm154, %v1069
  %1086 = vst [vmem:[#allocation3 + $0x40] sm:$0xff] %v1070
  %1087 = vst.msk [vmem:[#allocation3 + $0x48] sm:$0xff] %vm154, %v1071
  %1088 = vst [vmem:[#allocation3 + $0x50] sm:$0xff] %v1072
  %1089 = vst.msk [vmem:[#allocation3 + $0x58] sm:$0xff] %vm154, %v1073
  %1090 = vst [vmem:[#allocation3 + $0x60] sm:$0xff] %v1074
  %1091 = vst.msk [vmem:[#allocation3 + $0x68] sm:$0xff] %vm154, %v1075
  %1092 = vst [vmem:[#allocation3 + $0x70] sm:$0xff] %v1076
  %1093 = vst.msk [vmem:[#allocation3 + $0x78] sm:$0xff] %vm154, %v1077
  %v1094 = vld [vmem:[%s2 + $0xe0] sm:$0xff]
  %v1095 = vld [vmem:[%s2 + $0xe8] sm:$0xff]
  %v1096 = vld [vmem:[%s2 + $0xf0] sm:$0xff]
  %v1097 = vld [vmem:[%s2 + $0xf8] sm:$0xff]
  %v1098 = vld [vmem:[%s2 + $0x100] sm:$0xff]
  %v1099 = vld [vmem:[%s2 + $0x108] sm:$0xff]
  %v1100 = vld [vmem:[%s2 + $0x110] sm:$0xff]
  %v1101 = vld [vmem:[%s2 + $0x118] sm:$0xff]
  %v1102 = vld [vmem:[%s3 + $0x3] sm:$0x1]
  %v1103 = vperm.slane %v1102, 0
  %v1104 = vld [vmem:[#allocation3] sm:$0xff]
  %v1105 = vld [vmem:[#allocation3 + $0x8] sm:$0xff]
  %v1114 = vunpack.c.l.b16 %v1094
  %v1115 = vunpack.c.h.b16 %v1094
  %v1116 = vunpack.c.l.b16 %v1095
  %v1117 = vunpack.c.h.b16 %v1095
  %v1118 = vunpack.c.l.b16 %v1096
  %v1119 = vunpack.c.h.b16 %v1096
  %v1120 = vunpack.c.l.b16 %v1097
  %v1121 = vunpack.c.h.b16 %v1097
  %v1122 = vunpack.c.l.b16 %v1098
  %v1123 = vunpack.c.h.b16 %v1098
  %v1124 = vunpack.c.l.b16 %v1099
  %v1125 = vunpack.c.h.b16 %v1099
  %v1126 = vunpack.c.l.b16 %v1100
  %v1127 = vunpack.c.h.b16 %v1100
  %v1128 = vunpack.c.l.b16 %v1101
  %v1129 = vunpack.c.h.b16 %v1101
  %v1130 = vpack.c.b16 %v1116, %v1114
  %v1131 = vpack.c.b16 %v1117, %v1115
  %v1132 = vpack.c.b16 %v1120, %v1118
  %v1133 = vpack.c.b16 %v1121, %v1119
  %v1134 = vpack.c.b16 %v1124, %v1122
  %v1135 = vpack.c.b16 %v1125, %v1123
  %v1136 = vpack.c.b16 %v1128, %v1126
  %v1137 = vpack.c.b16 %v1129, %v1127
  %1146 = vmatpush.bf16.msra.mxu0 0
  %1147 = vmatpush.bf16.msra.mxu0 0
  %1148 = vmatpush.bf16.msra.mxu0 0
  %1149 = vmatpush.bf16.msra.mxu0 0
  %1150 = vmatpush.bf16.msra.mxu0 %v1136
  %1151 = vmatpush.bf16.msra.mxu0 %v1134
  %1152 = vmatpush.bf16.msra.mxu0 %v1132
  %1153 = vmatpush.bf16.msra.mxu0 %v1130
  %1154 = vmatmul.bf16.gmra.mxu0 %v223
  %v1155 = vpop.f32.mrf.mxu0
  %v1156 = vadd.f32 0.0, %v1155
  %v1157 = vpop.f32.mrf.mxu0
  %1158 = vdwg.mxu0
  %1159 = vmatpush.bf16.msra.mxu0 0
  %1160 = vmatpush.bf16.msra.mxu0 0
  %1161 = vmatpush.bf16.msra.mxu0 0
  %1162 = vmatpush.bf16.msra.mxu0 0
  %1163 = vmatpush.bf16.msra.mxu0 %v1137
  %1164 = vmatpush.bf16.msra.mxu0 %v1135
  %1165 = vmatpush.bf16.msra.mxu0 %v1133
  %1166 = vmatpush.bf16.msra.mxu0 %v1131
  %1167 = vmatmul.bf16.gmra.mxu0 %v223
  %v1168 = vpop.f32.mrf.mxu0
  %v1169 = vadd.f32 0.0, %v1168
  %v1170 = vpop.f32.mrf.mxu0
  %1171 = vdwg.mxu0
  %v1172 = vadd.f32 %v1104, %v1156
  %v1173 = vxor.u32 %v1172, 2147483648
  %v1174 = vmul.f32 %v1173, 1.442695
  %v1175 = vpow.pop %v1174
  %v1176 = vadd.f32 %v1175, 1.0
  %v1177 = vrcp.pop %v1176
  %v1178 = vmul.f32 %v1176, %v1177
  %v1179 = vsub.f32 1.0, %v1178
  %v1180 = vmul.f32 %v1177, %v1179
  %v1181 = vadd.f32 %v1177, %v1180
  %vm1182 = vweird.f32 %v1176
  %vm1183 = vweird.f32 %v1177
  %vm1184 = vmor %vm1182, %vm1183
  %v1185 = vsel %vm1184, %v1177, %v1181
  %v1186 = vand.u32 2147483647, %v1176
  %vm1187 = vcmp.eq.f32.partialorder %v1186, 8.507059e+37
  %v1188 = vand.u32 %v1176, 2147483648
  %v1189 = vor.u32 1.1754944e-38, %v1188
  %v1190 = vsel %vm1187, %v1189, %v1185
  %v1191 = vmul.f32 1.0, %v1190
  %v1192 = vadd.f32 %v1169, %v1103
  %v1193 = vmul.f32 %v1191, %v1192
  %v1194 = vadd.f32 %v1105, %v1193
  %v1195 = vtanh.pop %v1194
  %v1196 = vsub.f32 0.0, %v1195
  %1198 = vrot.lane.b32.xlu0 %v1196, 64
  %v1199 = vpop.permute.xlu0 %1198
  %v1201 = vmul.f32 %v1191, %v1199
  %1203 = vrot.lane.b32.xlu0 %v1201, 64
  %v1204 = vpop.permute.xlu0 %1203
  %v1206 = vadd.f32 %v1195, %v1204
  %v1207 = vld [vmem:[%s1] sm:$0xff]
  %vm1208 = vcmp.gt.f32.partialorder %v1207, 0.5
  %v1209 = vsel %vm1208, %v1206, 0.0
  %v1210 = vld [vmem:[#allocation3 + $0x10] sm:$0xff]
  %v1211 = vld [vmem:[#allocation3 + $0x18] sm:$0xff]
  %v1212 = vpack.c.bf16 %v1209, %v1209
  %v1214 = vsel %vm154, %v1212, 0
  %1216 = vmatpush.bf16.msra.mxu0 0
  %1217 = vmatpush.bf16.msra.mxu0 0
  %1218 = vmatpush.bf16.msra.mxu0 0
  %1219 = vmatpush.bf16.msra.mxu0 0
  %1220 = vmatpush.bf16.msra.mxu0 %v1136
  %1221 = vmatpush.bf16.msra.mxu0 %v1134
  %1222 = vmatpush.bf16.msra.mxu0 %v1132
  %1223 = vmatpush.bf16.msra.mxu0 %v1130
  %1224 = vmatmul.bf16.gmra.mxu0 %v1214
  %v1225 = vpop.f32.mrf.mxu0
  %v1226 = vadd.f32 0.0, %v1225
  %v1227 = vpop.f32.mrf.mxu0
  %1228 = vdwg.mxu0
  %1229 = vmatpush.bf16.msra.mxu0 0
  %1230 = vmatpush.bf16.msra.mxu0 0
  %1231 = vmatpush.bf16.msra.mxu0 0
  %1232 = vmatpush.bf16.msra.mxu0 0
  %1233 = vmatpush.bf16.msra.mxu0 %v1137
  %1234 = vmatpush.bf16.msra.mxu0 %v1135
  %1235 = vmatpush.bf16.msra.mxu0 %v1133
  %1236 = vmatpush.bf16.msra.mxu0 %v1131
  %1237 = vmatmul.bf16.gmra.mxu0 %v1214
  %v1238 = vpop.f32.mrf.mxu0
  %v1239 = vadd.f32 0.0, %v1238
  %v1240 = vpop.f32.mrf.mxu0
  %1241 = vdwg.mxu0
  %v1242 = vadd.f32 %v1210, %v1226
  %v1243 = vxor.u32 %v1242, 2147483648
  %v1244 = vmul.f32 %v1243, 1.442695
  %v1245 = vpow.pop %v1244
  %v1246 = vadd.f32 %v1245, 1.0
  %v1247 = vrcp.pop %v1246
  %v1248 = vmul.f32 %v1246, %v1247
  %v1249 = vsub.f32 1.0, %v1248
  %v1250 = vmul.f32 %v1247, %v1249
  %v1251 = vadd.f32 %v1247, %v1250
  %vm1252 = vweird.f32 %v1246
  %vm1253 = vweird.f32 %v1247
  %vm1254 = vmor %vm1252, %vm1253
  %v1255 = vsel %vm1254, %v1247, %v1251
  %v1256 = vand.u32 2147483647, %v1246
  %vm1257 = vcmp.eq.f32.partialorder %v1256, 8.507059e+37
  %v1258 = vand.u32 %v1246, 2147483648
  %v1259 = vor.u32 1.1754944e-38, %v1258
  %v1260 = vsel %vm1257, %v1259, %v1255
  %v1261 = vmul.f32 1.0, %v1260
  %v1262 = vadd.f32 %v1239, %v1103
  %v1263 = vmul.f32 %v1261, %v1262
  %v1264 = vadd.f32 %v1211, %v1263
  %v1265 = vtanh.pop %v1264
  %v1266 = vsub.f32 %v1209, %v1265
  %1268 = vrot.lane.b32.xlu0 %v1266, 64
  %v1269 = vpop.permute.xlu0 %1268
  %v1271 = vmul.f32 %v1261, %v1269
  %1273 = vrot.lane.b32.xlu0 %v1271, 64
  %v1274 = vpop.permute.xlu0 %1273
  %v1276 = vadd.f32 %v1265, %v1274
  %v1277 = vld [vmem:[%s1 + $0x8] sm:$0xff]
  %vm1278 = vcmp.gt.f32.partialorder %v1277, 0.5
  %v1279 = vsel %vm1278, %v1276, %v1209
  %v1280 = vld [vmem:[#allocation3 + $0x20] sm:$0xff]
  %v1281 = vld [vmem:[#allocation3 + $0x28] sm:$0xff]
  %v1282 = vpack.c.bf16 %v1279, %v1279
  %v1284 = vsel %vm154, %v1282, 0
  %1286 = vmatpush.bf16.msra.mxu0 0
  %1287 = vmatpush.bf16.msra.mxu0 0
  %1288 = vmatpush.bf16.msra.mxu0 0
  %1289 = vmatpush.bf16.msra.mxu0 0
  %1290 = vmatpush.bf16.msra.mxu0 %v1136
  %1291 = vmatpush.bf16.msra.mxu0 %v1134
  %1292 = vmatpush.bf16.msra.mxu0 %v1132
  %1293 = vmatpush.bf16.msra.mxu0 %v1130
  %1294 = vmatmul.bf16.gmra.mxu0 %v1284
  %v1295 = vpop.f32.mrf.mxu0
  %v1296 = vadd.f32 0.0, %v1295
  %v1297 = vpop.f32.mrf.mxu0
  %1298 = vdwg.mxu0
  %1299 = vmatpush.bf16.msra.mxu0 0
  %1300 = vmatpush.bf16.msra.mxu0 0
  %1301 = vmatpush.bf16.msra.mxu0 0
  %1302 = vmatpush.bf16.msra.mxu0 0
  %1303 = vmatpush.bf16.msra.mxu0 %v1137
  %1304 = vmatpush.bf16.msra.mxu0 %v1135
  %1305 = vmatpush.bf16.msra.mxu0 %v1133
  %1306 = vmatpush.bf16.msra.mxu0 %v1131
  %1307 = vmatmul.bf16.gmra.mxu0 %v1284
  %v1308 = vpop.f32.mrf.mxu0
  %v1309 = vadd.f32 0.0, %v1308
  %v1310 = vpop.f32.mrf.mxu0
  %1311 = vdwg.mxu0
  %v1312 = vadd.f32 %v1280, %v1296
  %v1313 = vxor.u32 %v1312, 2147483648
  %v1314 = vmul.f32 %v1313, 1.442695
  %v1315 = vpow.pop %v1314
  %v1316 = vadd.f32 %v1315, 1.0
  %v1317 = vrcp.pop %v1316
  %v1318 = vmul.f32 %v1316, %v1317
  %v1319 = vsub.f32 1.0, %v1318
  %v1320 = vmul.f32 %v1317, %v1319
  %v1321 = vadd.f32 %v1317, %v1320
  %vm1322 = vweird.f32 %v1316
  %vm1323 = vweird.f32 %v1317
  %vm1324 = vmor %vm1322, %vm1323
  %v1325 = vsel %vm1324, %v1317, %v1321
  %v1326 = vand.u32 2147483647, %v1316
  %vm1327 = vcmp.eq.f32.partialorder %v1326, 8.507059e+37
  %v1328 = vand.u32 %v1316, 2147483648
  %v1329 = vor.u32 1.1754944e-38, %v1328
  %v1330 = vsel %vm1327, %v1329, %v1325
  %v1331 = vmul.f32 1.0, %v1330
  %v1332 = vadd.f32 %v1309, %v1103
  %v1333 = vmul.f32 %v1331, %v1332
  %v1334 = vadd.f32 %v1281, %v1333
  %v1335 = vtanh.pop %v1334
  %v1336 = vsub.f32 %v1279, %v1335
  %1338 = vrot.lane.b32.xlu0 %v1336, 64
  %v1339 = vpop.permute.xlu0 %1338
  %v1341 = vmul.f32 %v1331, %v1339
  %1343 = vrot.lane.b32.xlu0 %v1341, 64
  %v1344 = vpop.permute.xlu0 %1343
  %v1346 = vadd.f32 %v1335, %v1344
  %v1347 = vld [vmem:[%s1 + $0x10] sm:$0xff]
  %vm1348 = vcmp.gt.f32.partialorder %v1347, 0.5
  %v1349 = vsel %vm1348, %v1346, %v1279
  %v1350 = vld [vmem:[#allocation3 + $0x30] sm:$0xff]
  %v1351 = vld [vmem:[#allocation3 + $0x38] sm:$0xff]
  %v1352 = vpack.c.bf16 %v1349, %v1349
  %v1354 = vsel %vm154, %v1352, 0
  %1356 = vmatpush.bf16.msra.mxu0 0
  %1357 = vmatpush.bf16.msra.mxu0 0
  %1358 = vmatpush.bf16.msra.mxu0 0
  %1359 = vmatpush.bf16.msra.mxu0 0
  %1360 = vmatpush.bf16.msra.mxu0 %v1136
  %1361 = vmatpush.bf16.msra.mxu0 %v1134
  %1362 = vmatpush.bf16.msra.mxu0 %v1132
  %1363 = vmatpush.bf16.msra.mxu0 %v1130
  %1364 = vmatmul.bf16.gmra.mxu0 %v1354
  %v1365 = vpop.f32.mrf.mxu0
  %v1366 = vadd.f32 0.0, %v1365
  %v1367 = vpop.f32.mrf.mxu0
  %1368 = vdwg.mxu0
  %1369 = vmatpush.bf16.msra.mxu0 0
  %1370 = vmatpush.bf16.msra.mxu0 0
  %1371 = vmatpush.bf16.msra.mxu0 0
  %1372 = vmatpush.bf16.msra.mxu0 0
  %1373 = vmatpush.bf16.msra.mxu0 %v1137
  %1374 = vmatpush.bf16.msra.mxu0 %v1135
  %1375 = vmatpush.bf16.msra.mxu0 %v1133
  %1376 = vmatpush.bf16.msra.mxu0 %v1131
  %1377 = vmatmul.bf16.gmra.mxu0 %v1354
  %v1378 = vpop.f32.mrf.mxu0
  %v1379 = vadd.f32 0.0, %v1378
  %v1380 = vpop.f32.mrf.mxu0
  %1381 = vdwg.mxu0
  %v1382 = vadd.f32 %v1350, %v1366
  %v1383 = vxor.u32 %v1382, 2147483648
  %v1384 = vmul.f32 %v1383, 1.442695
  %v1385 = vpow.pop %v1384
  %v1386 = vadd.f32 %v1385, 1.0
  %v1387 = vrcp.pop %v1386
  %v1388 = vmul.f32 %v1386, %v1387
  %v1389 = vsub.f32 1.0, %v1388
  %v1390 = vmul.f32 %v1387, %v1389
  %v1391 = vadd.f32 %v1387, %v1390
  %vm1392 = vweird.f32 %v1386
  %vm1393 = vweird.f32 %v1387
  %vm1394 = vmor %vm1392, %vm1393
  %v1395 = vsel %vm1394, %v1387, %v1391
  %v1396 = vand.u32 2147483647, %v1386
  %vm1397 = vcmp.eq.f32.partialorder %v1396, 8.507059e+37
  %v1398 = vand.u32 %v1386, 2147483648
  %v1399 = vor.u32 1.1754944e-38, %v1398
  %v1400 = vsel %vm1397, %v1399, %v1395
  %v1401 = vmul.f32 1.0, %v1400
  %v1402 = vadd.f32 %v1379, %v1103
  %v1403 = vmul.f32 %v1401, %v1402
  %v1404 = vadd.f32 %v1351, %v1403
  %v1405 = vtanh.pop %v1404
  %v1406 = vsub.f32 %v1349, %v1405
  %1408 = vrot.lane.b32.xlu0 %v1406, 64
  %v1409 = vpop.permute.xlu0 %1408
  %v1411 = vmul.f32 %v1401, %v1409
  %1413 = vrot.lane.b32.xlu0 %v1411, 64
  %v1414 = vpop.permute.xlu0 %1413
  %v1416 = vadd.f32 %v1405, %v1414
  %v1417 = vld [vmem:[%s1 + $0x18] sm:$0xff]
  %vm1418 = vcmp.gt.f32.partialorder %v1417, 0.5
  %v1419 = vsel %vm1418, %v1416, %v1349
  %v1420 = vld [vmem:[#allocation3 + $0x40] sm:$0xff]
  %v1421 = vld [vmem:[#allocation3 + $0x48] sm:$0xff]
  %v1422 = vpack.c.bf16 %v1419, %v1419
  %v1424 = vsel %vm154, %v1422, 0
  %1426 = vmatpush.bf16.msra.mxu0 0
  %1427 = vmatpush.bf16.msra.mxu0 0
  %1428 = vmatpush.bf16.msra.mxu0 0
  %1429 = vmatpush.bf16.msra.mxu0 0
  %1430 = vmatpush.bf16.msra.mxu0 %v1136
  %1431 = vmatpush.bf16.msra.mxu0 %v1134
  %1432 = vmatpush.bf16.msra.mxu0 %v1132
  %1433 = vmatpush.bf16.msra.mxu0 %v1130
  %1434 = vmatmul.bf16.gmra.mxu0 %v1424
  %v1435 = vpop.f32.mrf.mxu0
  %v1436 = vadd.f32 0.0, %v1435
  %v1437 = vpop.f32.mrf.mxu0
  %1438 = vdwg.mxu0
  %1439 = vmatpush.bf16.msra.mxu0 0
  %1440 = vmatpush.bf16.msra.mxu0 0
  %1441 = vmatpush.bf16.msra.mxu0 0
  %1442 = vmatpush.bf16.msra.mxu0 0
  %1443 = vmatpush.bf16.msra.mxu0 %v1137
  %1444 = vmatpush.bf16.msra.mxu0 %v1135
  %1445 = vmatpush.bf16.msra.mxu0 %v1133
  %1446 = vmatpush.bf16.msra.mxu0 %v1131
  %1447 = vmatmul.bf16.gmra.mxu0 %v1424
  %v1448 = vpop.f32.mrf.mxu0
  %v1449 = vadd.f32 0.0, %v1448
  %v1450 = vpop.f32.mrf.mxu0
  %1451 = vdwg.mxu0
  %v1452 = vadd.f32 %v1420, %v1436
  %v1453 = vxor.u32 %v1452, 2147483648
  %v1454 = vmul.f32 %v1453, 1.442695
  %v1455 = vpow.pop %v1454
  %v1456 = vadd.f32 %v1455, 1.0
  %v1457 = vrcp.pop %v1456
  %v1458 = vmul.f32 %v1456, %v1457
  %v1459 = vsub.f32 1.0, %v1458
  %v1460 = vmul.f32 %v1457, %v1459
  %v1461 = vadd.f32 %v1457, %v1460
  %vm1462 = vweird.f32 %v1456
  %vm1463 = vweird.f32 %v1457
  %vm1464 = vmor %vm1462, %vm1463
  %v1465 = vsel %vm1464, %v1457, %v1461
  %v1466 = vand.u32 2147483647, %v1456
  %vm1467 = vcmp.eq.f32.partialorder %v1466, 8.507059e+37
  %v1468 = vand.u32 %v1456, 2147483648
  %v1469 = vor.u32 1.1754944e-38, %v1468
  %v1470 = vsel %vm1467, %v1469, %v1465
  %v1471 = vmul.f32 1.0, %v1470
  %v1472 = vadd.f32 %v1449, %v1103
  %v1473 = vmul.f32 %v1471, %v1472
  %v1474 = vadd.f32 %v1421, %v1473
  %v1475 = vtanh.pop %v1474
  %v1476 = vsub.f32 %v1419, %v1475
  %1478 = vrot.lane.b32.xlu0 %v1476, 64
  %v1479 = vpop.permute.xlu0 %1478
  %v1481 = vmul.f32 %v1471, %v1479
  %1483 = vrot.lane.b32.xlu0 %v1481, 64
  %v1484 = vpop.permute.xlu0 %1483
  %v1486 = vadd.f32 %v1475, %v1484
  %v1487 = vld [vmem:[%s1 + $0x20] sm:$0xff]
  %vm1488 = vcmp.gt.f32.partialorder %v1487, 0.5
  %v1489 = vsel %vm1488, %v1486, %v1419
  %v1490 = vld [vmem:[#allocation3 + $0x50] sm:$0xff]
  %v1491 = vld [vmem:[#allocation3 + $0x58] sm:$0xff]
  %v1492 = vpack.c.bf16 %v1489, %v1489
  %v1494 = vsel %vm154, %v1492, 0
  %1496 = vmatpush.bf16.msra.mxu0 0
  %1497 = vmatpush.bf16.msra.mxu0 0
  %1498 = vmatpush.bf16.msra.mxu0 0
  %1499 = vmatpush.bf16.msra.mxu0 0
  %1500 = vmatpush.bf16.msra.mxu0 %v1136
  %1501 = vmatpush.bf16.msra.mxu0 %v1134
  %1502 = vmatpush.bf16.msra.mxu0 %v1132
  %1503 = vmatpush.bf16.msra.mxu0 %v1130
  %1504 = vmatmul.bf16.gmra.mxu0 %v1494
  %v1505 = vpop.f32.mrf.mxu0
  %v1506 = vadd.f32 0.0, %v1505
  %v1507 = vpop.f32.mrf.mxu0
  %1508 = vdwg.mxu0
  %1509 = vmatpush.bf16.msra.mxu0 0
  %1510 = vmatpush.bf16.msra.mxu0 0
  %1511 = vmatpush.bf16.msra.mxu0 0
  %1512 = vmatpush.bf16.msra.mxu0 0
  %1513 = vmatpush.bf16.msra.mxu0 %v1137
  %1514 = vmatpush.bf16.msra.mxu0 %v1135
  %1515 = vmatpush.bf16.msra.mxu0 %v1133
  %1516 = vmatpush.bf16.msra.mxu0 %v1131
  %1517 = vmatmul.bf16.gmra.mxu0 %v1494
  %v1518 = vpop.f32.mrf.mxu0
  %v1519 = vadd.f32 0.0, %v1518
  %v1520 = vpop.f32.mrf.mxu0
  %1521 = vdwg.mxu0
  %v1522 = vadd.f32 %v1490, %v1506
  %v1523 = vxor.u32 %v1522, 2147483648
  %v1524 = vmul.f32 %v1523, 1.442695
  %v1525 = vpow.pop %v1524
  %v1526 = vadd.f32 %v1525, 1.0
  %v1527 = vrcp.pop %v1526
  %v1528 = vmul.f32 %v1526, %v1527
  %v1529 = vsub.f32 1.0, %v1528
  %v1530 = vmul.f32 %v1527, %v1529
  %v1531 = vadd.f32 %v1527, %v1530
  %vm1532 = vweird.f32 %v1526
  %vm1533 = vweird.f32 %v1527
  %vm1534 = vmor %vm1532, %vm1533
  %v1535 = vsel %vm1534, %v1527, %v1531
  %v1536 = vand.u32 2147483647, %v1526
  %vm1537 = vcmp.eq.f32.partialorder %v1536, 8.507059e+37
  %v1538 = vand.u32 %v1526, 2147483648
  %v1539 = vor.u32 1.1754944e-38, %v1538
  %v1540 = vsel %vm1537, %v1539, %v1535
  %v1541 = vmul.f32 1.0, %v1540
  %v1542 = vadd.f32 %v1519, %v1103
  %v1543 = vmul.f32 %v1541, %v1542
  %v1544 = vadd.f32 %v1491, %v1543
  %v1545 = vtanh.pop %v1544
  %v1546 = vsub.f32 %v1489, %v1545
  %1548 = vrot.lane.b32.xlu0 %v1546, 64
  %v1549 = vpop.permute.xlu0 %1548
  %v1551 = vmul.f32 %v1541, %v1549
  %1553 = vrot.lane.b32.xlu0 %v1551, 64
  %v1554 = vpop.permute.xlu0 %1553
  %v1556 = vadd.f32 %v1545, %v1554
  %v1557 = vld [vmem:[%s1 + $0x28] sm:$0xff]
  %vm1558 = vcmp.gt.f32.partialorder %v1557, 0.5
  %v1559 = vsel %vm1558, %v1556, %v1489
  %v1560 = vld [vmem:[#allocation3 + $0x60] sm:$0xff]
  %v1561 = vld [vmem:[#allocation3 + $0x68] sm:$0xff]
  %v1562 = vpack.c.bf16 %v1559, %v1559
  %v1564 = vsel %vm154, %v1562, 0
  %1566 = vmatpush.bf16.msra.mxu0 0
  %1567 = vmatpush.bf16.msra.mxu0 0
  %1568 = vmatpush.bf16.msra.mxu0 0
  %1569 = vmatpush.bf16.msra.mxu0 0
  %1570 = vmatpush.bf16.msra.mxu0 %v1136
  %1571 = vmatpush.bf16.msra.mxu0 %v1134
  %1572 = vmatpush.bf16.msra.mxu0 %v1132
  %1573 = vmatpush.bf16.msra.mxu0 %v1130
  %1574 = vmatmul.bf16.gmra.mxu0 %v1564
  %v1575 = vpop.f32.mrf.mxu0
  %v1576 = vadd.f32 0.0, %v1575
  %v1577 = vpop.f32.mrf.mxu0
  %1578 = vdwg.mxu0
  %1579 = vmatpush.bf16.msra.mxu0 0
  %1580 = vmatpush.bf16.msra.mxu0 0
  %1581 = vmatpush.bf16.msra.mxu0 0
  %1582 = vmatpush.bf16.msra.mxu0 0
  %1583 = vmatpush.bf16.msra.mxu0 %v1137
  %1584 = vmatpush.bf16.msra.mxu0 %v1135
  %1585 = vmatpush.bf16.msra.mxu0 %v1133
  %1586 = vmatpush.bf16.msra.mxu0 %v1131
  %1587 = vmatmul.bf16.gmra.mxu0 %v1564
  %v1588 = vpop.f32.mrf.mxu0
  %v1589 = vadd.f32 0.0, %v1588
  %v1590 = vpop.f32.mrf.mxu0
  %1591 = vdwg.mxu0
  %v1592 = vadd.f32 %v1560, %v1576
  %v1593 = vxor.u32 %v1592, 2147483648
  %v1594 = vmul.f32 %v1593, 1.442695
  %v1595 = vpow.pop %v1594
  %v1596 = vadd.f32 %v1595, 1.0
  %v1597 = vrcp.pop %v1596
  %v1598 = vmul.f32 %v1596, %v1597
  %v1599 = vsub.f32 1.0, %v1598
  %v1600 = vmul.f32 %v1597, %v1599
  %v1601 = vadd.f32 %v1597, %v1600
  %vm1602 = vweird.f32 %v1596
  %vm1603 = vweird.f32 %v1597
  %vm1604 = vmor %vm1602, %vm1603
  %v1605 = vsel %vm1604, %v1597, %v1601
  %v1606 = vand.u32 2147483647, %v1596
  %vm1607 = vcmp.eq.f32.partialorder %v1606, 8.507059e+37
  %v1608 = vand.u32 %v1596, 2147483648
  %v1609 = vor.u32 1.1754944e-38, %v1608
  %v1610 = vsel %vm1607, %v1609, %v1605
  %v1611 = vmul.f32 1.0, %v1610
  %v1612 = vadd.f32 %v1589, %v1103
  %v1613 = vmul.f32 %v1611, %v1612
  %v1614 = vadd.f32 %v1561, %v1613
  %v1615 = vtanh.pop %v1614
  %v1616 = vsub.f32 %v1559, %v1615
  %1618 = vrot.lane.b32.xlu0 %v1616, 64
  %v1619 = vpop.permute.xlu0 %1618
  %v1621 = vmul.f32 %v1611, %v1619
  %1623 = vrot.lane.b32.xlu0 %v1621, 64
  %v1624 = vpop.permute.xlu0 %1623
  %v1626 = vadd.f32 %v1615, %v1624
  %v1627 = vld [vmem:[%s1 + $0x30] sm:$0xff]
  %vm1628 = vcmp.gt.f32.partialorder %v1627, 0.5
  %v1629 = vsel %vm1628, %v1626, %v1559
  %v1630 = vld [vmem:[#allocation3 + $0x70] sm:$0xff]
  %v1631 = vld [vmem:[#allocation3 + $0x78] sm:$0xff]
  %v1632 = vpack.c.bf16 %v1629, %v1629
  %v1634 = vsel %vm154, %v1632, 0
  %1636 = vmatpush.bf16.msra.mxu0 0
  %1637 = vmatpush.bf16.msra.mxu0 0
  %1638 = vmatpush.bf16.msra.mxu0 0
  %1639 = vmatpush.bf16.msra.mxu0 0
  %1640 = vmatpush.bf16.msra.mxu0 %v1136
  %1641 = vmatpush.bf16.msra.mxu0 %v1134
  %1642 = vmatpush.bf16.msra.mxu0 %v1132
  %1643 = vmatpush.bf16.msra.mxu0 %v1130
  %1644 = vmatmul.bf16.gmra.mxu0 %v1634
  %v1645 = vpop.f32.mrf.mxu0
  %v1646 = vadd.f32 0.0, %v1645
  %v1647 = vpop.f32.mrf.mxu0
  %1648 = vdwg.mxu0
  %1649 = vmatpush.bf16.msra.mxu0 0
  %1650 = vmatpush.bf16.msra.mxu0 0
  %1651 = vmatpush.bf16.msra.mxu0 0
  %1652 = vmatpush.bf16.msra.mxu0 0
  %1653 = vmatpush.bf16.msra.mxu0 %v1137
  %1654 = vmatpush.bf16.msra.mxu0 %v1135
  %1655 = vmatpush.bf16.msra.mxu0 %v1133
  %1656 = vmatpush.bf16.msra.mxu0 %v1131
  %1657 = vmatmul.bf16.gmra.mxu0 %v1634
  %v1658 = vpop.f32.mrf.mxu0
  %v1659 = vadd.f32 0.0, %v1658
  %v1660 = vpop.f32.mrf.mxu0
  %1661 = vdwg.mxu0
  %v1662 = vadd.f32 %v1630, %v1646
  %v1663 = vxor.u32 %v1662, 2147483648
  %v1664 = vmul.f32 %v1663, 1.442695
  %v1665 = vpow.pop %v1664
  %v1666 = vadd.f32 %v1665, 1.0
  %v1667 = vrcp.pop %v1666
  %v1668 = vmul.f32 %v1666, %v1667
  %v1669 = vsub.f32 1.0, %v1668
  %v1670 = vmul.f32 %v1667, %v1669
  %v1671 = vadd.f32 %v1667, %v1670
  %vm1672 = vweird.f32 %v1666
  %vm1673 = vweird.f32 %v1667
  %vm1674 = vmor %vm1672, %vm1673
  %v1675 = vsel %vm1674, %v1667, %v1671
  %v1676 = vand.u32 2147483647, %v1666
  %vm1677 = vcmp.eq.f32.partialorder %v1676, 8.507059e+37
  %v1678 = vand.u32 %v1666, 2147483648
  %v1679 = vor.u32 1.1754944e-38, %v1678
  %v1680 = vsel %vm1677, %v1679, %v1675
  %v1681 = vmul.f32 1.0, %v1680
  %v1682 = vadd.f32 %v1659, %v1103
  %v1683 = vmul.f32 %v1681, %v1682
  %v1684 = vadd.f32 %v1631, %v1683
  %v1685 = vtanh.pop %v1684
  %v1686 = vsub.f32 %v1629, %v1685
  %1688 = vrot.lane.b32.xlu0 %v1686, 64
  %v1689 = vpop.permute.xlu0 %1688
  %v1691 = vmul.f32 %v1681, %v1689
  %1693 = vrot.lane.b32.xlu0 %v1691, 64
  %v1694 = vpop.permute.xlu0 %1693
  %v1696 = vadd.f32 %v1685, %v1694
  %v1697 = vld [vmem:[%s1 + $0x38] sm:$0xff]
  %vm1698 = vcmp.gt.f32.partialorder %v1697, 0.5
  %v1699 = vsel %vm1698, %v1696, %v1629
  %v1700 = vpack.c.bf16 %v1699, %v1699
  %v1701 = vld [vmem:[%s4] sm:$0xf]
  %v1702 = vld [vmem:[%s4 + $0x4] sm:$0xf]
  %v1703 = vld [vmem:[%s4 + $0x8] sm:$0xf]
  %v1704 = vld [vmem:[%s4 + $0xc] sm:$0xf]
  %v1705 = vld [vmem:[%s4 + $0x10] sm:$0xf]
  %v1706 = vld [vmem:[%s4 + $0x14] sm:$0xf]
  %v1707 = vld [vmem:[%s4 + $0x18] sm:$0xf]
  %v1708 = vld [vmem:[%s4 + $0x1c] sm:$0xf]
  %v1709 = vld [vmem:[%s5] sm:$0x1]
  %v1711 = vperm.slane %v1709, 0
  %v1721 = vunpack.c.l.b16 %v1701
  %v1722 = vunpack.c.l.b16 %v1702
  %v1723 = vunpack.c.l.b16 %v1703
  %v1724 = vunpack.c.l.b16 %v1704
  %v1725 = vunpack.c.l.b16 %v1705
  %v1726 = vunpack.c.l.b16 %v1706
  %v1727 = vunpack.c.l.b16 %v1707
  %v1728 = vunpack.c.l.b16 %v1708
  %v1729 = vpack.c.b16 %v1722, %v1721
  %v1730 = vpack.c.b16 %v1724, %v1723
  %v1731 = vpack.c.b16 %v1726, %v1725
  %v1732 = vpack.c.b16 %v1728, %v1727
  %v1738 = vsel %vm154, %v1700, 0
  %1740 = vmatpush.bf16.msra.mxu0 0
  %1741 = vmatpush.bf16.msra.mxu0 0
  %1742 = vmatpush.bf16.msra.mxu0 0
  %1743 = vmatpush.bf16.msra.mxu0 0
  %1744 = vmatpush.bf16.msra.mxu0 %v1732
  %1745 = vmatpush.bf16.msra.mxu0 %v1731
  %1746 = vmatpush.bf16.msra.mxu0 %v1730
  %1747 = vmatpush.bf16.msra.mxu0 %v1729
  %1748 = vmatmul.bf16.gmra.mxu0 %v1738
  %v1749 = vpop.f32.mrf.mxu0
  %v1750 = vadd.f32 %v1711, %v1749
  %v1751 = vpop.f32.mrf.mxu0
  %1752 = vdwg.mxu0
  %1753 = vst.msk [vmem:[%s6] sm:$0xff] %vm82, %v1750
  // Predicated region
  $region26: #{relation_encoder_forward.1} parent=0 // pred_check
    _
  $region27: #{relation_encoder_forward.1} parent=0 // pred_check_branch
    %1755 = sbr.rel (0) target = $region29
  $region28: #{relation_encoder_forward.1} parent=0 // pred_region
    _
  $region29: #{relation_encoder_forward.1} parent=0 // pred_fallthru
    _
  // Predicated region
  $region30: #{relation_encoder_forward.1} parent=0 // pred_check
    _
  $region31: #{relation_encoder_forward.1} parent=0 // pred_check_branch
    %1757 = sbr.rel (0) target = $region33
  $region32: #{relation_encoder_forward.1} parent=0 // pred_region
    _
  $region33: #{relation_encoder_forward.1} parent=0 // pred_fallthru
    _

</llo_original>
